<compile_context>
chip_gen: v7x
topology: tpu7x:2x2x1
jax: 0.10.0
libtpu: 0.0.40
codegen_flags: <defaults>
</compile_context>

<pallas_src>
import jax
import jax.numpy as jnp
from jax.experimental import pallas as pl
from jax.experimental.pallas import tpu as pltpu


def _round_up(x, m):
    return (x + m - 1) // m * m


# ----------------------------------------------------------------------------- kernels

def _lora_qkv_kernel(x_ref, wq_ref, wk_ref, wv_ref, bias_ref, a_ref, bq_ref, bv_ref, o_ref):
    """o[:, 0:C]  = x@Wq + bq + (x@A_q)@B_q
       o[:, C:2C] = x@Wk + bk
       o[:, 2C:]  = x@Wv + bv + (x@A_v)@B_v
    x is cast to the weights' compute dtype in-kernel; all accumulation in f32."""
    C = wq_ref.shape[1]
    r = bq_ref.shape[0]
    x = x_ref[...].astype(wq_ref.dtype)                       # (tm, C) bf16

    # Fused LoRA down-projection: one skinny matmul x @ [A_q | A_v] -> (tm, 2r).
    xa = jnp.dot(x, a_ref[...], preferred_element_type=jnp.float32)
    xa = xa.astype(bq_ref.dtype)

    # q column block: dense + LoRA up-projection, stored immediately (small live set).
    new_q = jnp.dot(xa[:, :r], bq_ref[...], preferred_element_type=jnp.float32)
    q = jnp.dot(x, wq_ref[...], preferred_element_type=jnp.float32)
    o_ref[:, 0:C] = (q + bias_ref[0:1, :] + new_q).astype(o_ref.dtype)

    # k column block: dense only.
    k = jnp.dot(x, wk_ref[...], preferred_element_type=jnp.float32)
    o_ref[:, C:2 * C] = (k + bias_ref[1:2, :]).astype(o_ref.dtype)

    # v column block: dense + LoRA up-projection.
    new_v = jnp.dot(xa[:, r:], bv_ref[...], preferred_element_type=jnp.float32)
    v = jnp.dot(x, wv_ref[...], preferred_element_type=jnp.float32)
    o_ref[:, 2 * C:] = (v + bias_ref[2:3, :] + new_v).astype(o_ref.dtype)


def _merged_qkv_kernel(x_ref, wq_ref, wk_ref, wv_ref, bias_ref, o_ref):
    """Dense-only path for frozen LoRA already folded into Wq / Wv."""
    C = wq_ref.shape[1]
    x = x_ref[...].astype(wq_ref.dtype)
    for idx, w_ref in enumerate((wq_ref, wk_ref, wv_ref)):      # unrolled at trace time
        acc = jnp.dot(x, w_ref[...], preferred_element_type=jnp.float32)
        o_ref[:, idx * C:(idx + 1) * C] = (acc + bias_ref[idx:idx + 1, :]).astype(o_ref.dtype)


# ----------------------------------------------------------------------------- wrapper

def prepare_lora_qkv_params(w_qkv, b_qkv, a_q, b_q, a_v, b_v, *,
                            compute_dtype=jnp.bfloat16, merge_lora=False):
    """Call ONCE for frozen weights (hoists the per-call HBM passes out of the hot path)."""
    C, out_dim = w_qkv.shape
    assert out_dim == 3 * C
    r = a_q.shape[1]
    wq = w_qkv[:, :C]
    wk = w_qkv[:, C:2 * C]
    wv = w_qkv[:, 2 * C:]
    if merge_lora:
        # Frozen-LoRA inference: fold the low-rank updates into the dense weights once.
        wq = wq + jnp.dot(a_q, b_q)
        wv = wv + jnp.dot(a_v, b_v)
    params = {
        "C": C, "r": r, "merged": merge_lora, "compute_dtype": compute_dtype,
        "wq": wq.astype(compute_dtype),
        "wk": wk.astype(compute_dtype),
        "wv": wv.astype(compute_dtype),
        "bias": b_qkv.reshape(3, C).astype(jnp.float32),        # bias stays f32
    }
    if not merge_lora:
        params["a_cat"] = jnp.concatenate([a_q, a_v], axis=1).astype(compute_dtype)
        params["b_q"] = b_q.astype(compute_dtype)
        params["b_v"] = b_v.astype(compute_dtype)
    return params


def lora_qkv_apply(params, x, *, tile_m=512, out_dtype=jnp.bfloat16,
                   single_buffer_weights=True):
    """Hot path. x: (B, H, W, C) -> (B, H, W, 3C) in `out_dtype` (bf16 by default).

    tile_m guidance: 512-1024 on v5e, 512 on v6e (multiple of 256), 256-512 on v7x."""
    B, H, W, C = x.shape
    assert C == params["C"]
    out_dim = 3 * C
    r = params["r"]
    compute_dtype = params["compute_dtype"]
    M = B * H * W

    # No pad / post-slice: ragged last block handled by Pallas' masked store.
    tm = min(_round_up(tile_m, 8), _round_up(M, 8))
    grid = (pl.cdiv(M, tm),)

    x2d = x.reshape(M, C)                                       # cast happens in-kernel

    if params["merged"]:
        kernel = _merged_qkv_kernel
        operands = [x2d, params["wq"], params["wk"], params["wv"], params["bias"]]
    else:
        kernel = _lora_qkv_kernel
        operands = [x2d, params["wq"], params["wk"], params["wv"], params["bias"],
                    params["a_cat"], params["b_q"], params["b_v"]]

    def _build_and_run(single_buf):
        if single_buf:
            # Resident operands (constant index_map): one VMEM copy instead of two.
            def resident(shape, imap):
                return pl.BlockSpec(shape, imap, pipeline_mode=pl.Buffered(1))
        else:
            def resident(shape, imap):
                return pl.BlockSpec(shape, imap)

        in_specs = [
            pl.BlockSpec((tm, C), lambda i: (i, 0)),            # x tile (double-buffered)
            resident((C, C), lambda i: (0, 0)),                 # W_q
            resident((C, C), lambda i: (0, 0)),                 # W_k
            resident((C, C), lambda i: (0, 0)),                 # W_v
            resident((3, C), lambda i: (0, 0)),                 # bias rows (q, k, v), f32
        ]
        if not params["merged"]:
            in_specs += [
                resident((C, 2 * r), lambda i: (0, 0)),         # [A_q | A_v]
                resident((r, C), lambda i: (0, 0)),             # B_q
                resident((r, C), lambda i: (0, 0)),             # B_v
            ]

        # VMEM budget: double-buffered x/out tiles + resident weights + in-flight f32
        # intermediates the compiler materializes inside the body.
        x_item = jnp.dtype(x.dtype).itemsize
        c_item = jnp.dtype(compute_dtype).itemsize
        o_item = jnp.dtype(out_dtype).itemsize
        w_bytes = 3 * C * C * c_item + 3 * C * 4
        if not params["merged"]:
            w_bytes += (C * 2 * r + 2 * r * C) * c_item
        est = (2 * tm * C * x_item
               + 2 * tm * out_dim * o_item
               + w_bytes * (1 if single_buf else 2)
               + tm * (2 * C + 2 * r) * 4)
        try:
            vmem_cap = pltpu.get_tpu_info().vmem_capacity_bytes
        except Exception:
            vmem_cap = 64 << 20                                 # assume smallest (v7x per-TC)
        vmem_limit = int(min(max(est + (8 << 20), 32 << 20), (vmem_cap * 3) // 4))

        return pl.pallas_call(
            kernel,
            out_shape=jax.ShapeDtypeStruct((M, out_dim), out_dtype),
            grid_spec=pltpu.PrefetchScalarGridSpec(
                num_scalar_prefetch=0,
                grid=grid,
                in_specs=in_specs,
                out_specs=pl.BlockSpec((tm, out_dim), lambda i: (i, 0)),
            ),
            compiler_params=pltpu.CompilerParams(
                dimension_semantics=("parallel",),               # token axis -> megacore on v7x
                vmem_limit_bytes=vmem_limit,
            ),
        )(*operands)

    if single_buffer_weights:
        try:
            out2d = _build_and_run(True)
        except Exception:
            # pl.Buffered(1) not supported by this jax/libtpu -> default double buffering.
            out2d = _build_and_run(False)
    else:
        out2d = _build_and_run(False)

    return out2d.reshape(B, H, W, out_dim)


def lora_qkv(x, w_qkv, b_qkv, a_q, b_q, a_v, b_v, *, compute_dtype=jnp.bfloat16,
             merge_lora=False, tile_m=512, out_dtype=jnp.bfloat16,
             single_buffer_weights=True):
    """One-shot convenience wrapper. For repeated calls with frozen weights, call
    prepare_lora_qkv_params once and reuse the result with lora_qkv_apply."""
    params = prepare_lora_qkv_params(w_qkv, b_qkv, a_q, b_q, a_v, b_v,
                                     compute_dtype=compute_dtype, merge_lora=merge_lora)
    return lora_qkv_apply(params, x, tile_m=tile_m, out_dtype=out_dtype,
                          single_buffer_weights=single_buffer_weights)


# ----------------------------------------------------------------------------- references

def _reference_f32(x, w_qkv, b_qkv, a_q, b_q, a_v, b_v):
    """Pure f32 semantics of the PyTorch module."""
    C = x.shape[-1]
    qkv = jnp.einsum("bhwc,cd->bhwd", x, w_qkv) + b_qkv
    new_q = jnp.einsum("bhwc,cr,rd->bhwd", x, a_q, b_q)
    new_v = jnp.einsum("bhwc,cr,rd->bhwd", x, a_v, b_v)
    qkv = qkv.at[..., :C].add(new_q)
    qkv = qkv.at[..., -C:].add(new_v)
    return qkv


def _reference_matched(x, w_qkv, b_qkv, a_q, b_q, a_v, b_v, compute_dtype, out_dtype):
    """Mirrors the kernel precision: bf16 operands, f32 accumulation, bf16 LoRA intermediate."""
    f32 = jnp.float32
    C = x.shape[-1]
    xc = x.astype(compute_dtype).astype(f32)
    wq = w_qkv[:, :C].astype(compute_dtype).astype(f32)
    wk = w_qkv[:, C:2 * C].astype(compute_dtype).astype(f32)
    wv = w_qkv[:, 2 * C:].astype(compute_dtype).astype(f32)
    aq = a_q.astype(compute_dtype).astype(f32)
    av = a_v.astype(compute_dtype).astype(f32)
    bq = b_q.astype(compute_dtype).astype(f32)
    bv = b_v.astype(compute_dtype).astype(f32)
    bias = b_qkv.astype(f32)
    xaq = jnp.einsum("bhwc,cr->bhwr", xc, aq).astype(compute_dtype).astype(f32)
    xav = jnp.einsum("bhwc,cr->bhwr", xc, av).astype(compute_dtype).astype(f32)
    q = jnp.einsum("bhwc,cd->bhwd", xc, wq) + bias[:C] + jnp.einsum("bhwr,rd->bhwd", xaq, bq)
    k = jnp.einsum("bhwc,cd->bhwd", xc, wk) + bias[C:2 * C]
    v = jnp.einsum("bhwc,cd->bhwd", xc, wv) + bias[2 * C:] + jnp.einsum("bhwr,rd->bhwd", xav, bv)
    return jnp.concatenate([q, k, v], axis=-1).astype(out_dtype)


# ----------------------------------------------------------------------------- demo / checks

if __name__ == "__main__":
    # Small shapes consistent with the module: x (B, H, W, C), qkv Linear(C -> 3C), LoRA rank r.
    B, H, W, C, r = 2, 8, 8, 32, 4

    key = jax.random.PRNGKey(0)
    kx, kw, kb, ka1, kb1, ka2, kb2 = jax.random.split(key, 7)
    x = jax.random.normal(kx, (B, H, W, C), dtype=jnp.float32)
    w_qkv = jax.random.normal(kw, (C, 3 * C), dtype=jnp.float32) * 0.05
    b_qkv = jax.random.normal(kb, (3 * C,), dtype=jnp.float32) * 0.05
    a_q = jax.random.normal(ka1, (C, r), dtype=jnp.float32) * 0.05
    b_q = jax.random.normal(kb1, (r, C), dtype=jnp.float32) * 0.05
    a_v = jax.random.normal(ka2, (C, r), dtype=jnp.float32) * 0.05
    b_v = jax.random.normal(kb2, (r, C), dtype=jnp.float32) * 0.05

    ref_f = _reference_f32(x, w_qkv, b_qkv, a_q, b_q, a_v, b_v)

    # Prepare-once (frozen weights), then the hot-path apply (LoRA path kept, bf16 output).
    params = prepare_lora_qkv_params(w_qkv, b_qkv, a_q, b_q, a_v, b_v)
    out = jax.block_until_ready(lora_qkv_apply(params, x))
    assert out.shape == (B, H, W, 3 * C)
    assert jnp.allclose(out.astype(jnp.float32), ref_f, atol=5e-2, rtol=5e-2)

    # f32-output path checked tightly against the precision-matched reference.
    out_f32 = jax.block_until_ready(lora_qkv_apply(params, x, out_dtype=jnp.float32))
    ref_m = _reference_matched(x, w_qkv, b_qkv, a_q, b_q, a_v, b_v, jnp.bfloat16, jnp.float32)
    assert jnp.allclose(out_f32, ref_m, atol=1e-3, rtol=1e-3)

    # Frozen-LoRA inference path: LoRA folded into the dense weights, dense-only kernel.
    params_m = prepare_lora_qkv_params(w_qkv, b_qkv, a_q, b_q, a_v, b_v, merge_lora=True)
    out_m = jax.block_until_ready(lora_qkv_apply(params_m, x))
    assert jnp.allclose(out_m.astype(jnp.float32), ref_f, atol=5e-2, rtol=5e-2)

    # Ragged token count (M not a multiple of the tile): masked last block, no pad/slice pass.
    x_r = x[:, :5]                                       # (2, 5, 8, 32) -> M = 80, tm = 32
    out_r = jax.block_until_ready(lora_qkv_apply(params, x_r, tile_m=32))
    ref_r = _reference_f32(x_r, w_qkv, b_qkv, a_q, b_q, a_v, b_v)
    assert jnp.allclose(out_r.astype(jnp.float32), ref_r, atol=5e-2, rtol=5e-2)

    print("KERNEL_OK")
</pallas_src>

<mosaic_0001>
module attributes {stable_mosaic.version = 11 : i64} {
  func.func @_lora_qkv_kernel(%arg0: i32, %arg1: memref<128x32xf32, #tpu.memory_space<vmem>>, %arg2: memref<32x32xbf16, #tpu.memory_space<vmem>>, %arg3: memref<32x32xbf16, #tpu.memory_space<vmem>>, %arg4: memref<32x32xbf16, #tpu.memory_space<vmem>>, %arg5: memref<3x32xf32, #tpu.memory_space<vmem>>, %arg6: memref<32x8xbf16, #tpu.memory_space<vmem>>, %arg7: memref<4x32xbf16, #tpu.memory_space<vmem>>, %arg8: memref<4x32xbf16, #tpu.memory_space<vmem>>, %arg9: memref<128x96xbf16, #tpu.memory_space<vmem>>) attributes {dimension_semantics = [#tpu.dimension_semantics<parallel>], iteration_bounds = array<i64: 1>, scalar_prefetch = 0 : i64, scratch_operands = 0 : i64, tpu.core_type = #tpu.core_type<tc>, window_params = [{transform_indices = @transform_0, window_bounds = array<i64: 128, 32>}, {pipeline_mode = #tpu.pipeline_mode<synchronous>, transform_indices = @transform_1, window_bounds = array<i64: 32, 32>}, {pipeline_mode = #tpu.pipeline_mode<synchronous>, transform_indices = @transform_2, window_bounds = array<i64: 32, 32>}, {pipeline_mode = #tpu.pipeline_mode<synchronous>, transform_indices = @transform_3, window_bounds = array<i64: 32, 32>}, {pipeline_mode = #tpu.pipeline_mode<synchronous>, transform_indices = @transform_4, window_bounds = array<i64: 3, 32>}, {pipeline_mode = #tpu.pipeline_mode<synchronous>, transform_indices = @transform_5, window_bounds = array<i64: 32, 8>}, {pipeline_mode = #tpu.pipeline_mode<synchronous>, transform_indices = @transform_6, window_bounds = array<i64: 4, 32>}, {pipeline_mode = #tpu.pipeline_mode<synchronous>, transform_indices = @transform_7, window_bounds = array<i64: 4, 32>}, {transform_indices = @transform_8, window_bounds = array<i64: 128, 96>}]} {
    %c0 = arith.constant 0 : index
    %c0_0 = arith.constant 0 : index
    %0 = vector.load %arg1[%c0, %c0_0] : memref<128x32xf32, #tpu.memory_space<vmem>>, vector<128x32xf32>
    %1 = arith.truncf %0 : vector<128x32xf32> to vector<128x32xbf16>
    %c0_1 = arith.constant 0 : index
    %c0_2 = arith.constant 0 : index
    %2 = vector.load %arg6[%c0_1, %c0_2] : memref<32x8xbf16, #tpu.memory_space<vmem>>, vector<32x8xbf16>
    %cst = arith.constant dense<0.000000e+00> : vector<128x8xf32>
    %3 = tpu.matmul %1, %2, %cst {dimension_numbers = #tpu.dot_dimension_numbers<[1], [0], [0], [1], [0, 0, 1, 1], [], []>} : vector<128x32xbf16>, vector<32x8xbf16>, vector<128x8xf32> -> vector<128x8xf32>
    %4 = arith.truncf %3 : vector<128x8xf32> to vector<128x8xbf16>
    %5 = vector.extract_strided_slice %4 {offsets = [0, 0], sizes = [128, 4], strides = [1, 1]} : vector<128x8xbf16> to vector<128x4xbf16>
    %c0_3 = arith.constant 0 : index
    %c0_4 = arith.constant 0 : index
    %6 = vector.load %arg7[%c0_3, %c0_4] : memref<4x32xbf16, #tpu.memory_space<vmem>>, vector<4x32xbf16>
    %cst_5 = arith.constant dense<0.000000e+00> : vector<128x32xf32>
    %7 = tpu.matmul %5, %6, %cst_5 {dimension_numbers = #tpu.dot_dimension_numbers<[1], [0], [0], [1], [0, 0, 1, 1], [], []>} : vector<128x4xbf16>, vector<4x32xbf16>, vector<128x32xf32> -> vector<128x32xf32>
    %c0_6 = arith.constant 0 : index
    %c0_7 = arith.constant 0 : index
    %8 = vector.load %arg2[%c0_6, %c0_7] : memref<32x32xbf16, #tpu.memory_space<vmem>>, vector<32x32xbf16>
    %cst_8 = arith.constant dense<0.000000e+00> : vector<128x32xf32>
    %9 = tpu.matmul %1, %8, %cst_8 {dimension_numbers = #tpu.dot_dimension_numbers<[1], [0], [0], [1], [0, 0, 1, 1], [], []>} : vector<128x32xbf16>, vector<32x32xbf16>, vector<128x32xf32> -> vector<128x32xf32>
    %c0_9 = arith.constant 0 : index
    %c0_10 = arith.constant 0 : index
    %10 = vector.load %arg5[%c0_9, %c0_10] : memref<3x32xf32, #tpu.memory_space<vmem>>, vector<1x32xf32>
    %11 = vector.broadcast %10 : vector<1x32xf32> to vector<128x32xf32>
    %12 = arith.addf %9, %11 : vector<128x32xf32>
    %13 = arith.addf %12, %7 : vector<128x32xf32>
    %14 = arith.truncf %13 : vector<128x32xf32> to vector<128x32xbf16>
    %c0_11 = arith.constant 0 : index
    %c0_12 = arith.constant 0 : index
    %15 = vector.load %arg9[%c0_11, %c0_12] : memref<128x96xbf16, #tpu.memory_space<vmem>>, vector<128x32xbf16>
    tpu.vector_store %arg9[%c0_11, %c0_12], %14 {strides = array<i32>} : memref<128x96xbf16, #tpu.memory_space<vmem>>, vector<128x32xbf16>,
    %c0_13 = arith.constant 0 : index
    %c0_14 = arith.constant 0 : index
    %16 = vector.load %arg3[%c0_13, %c0_14] : memref<32x32xbf16, #tpu.memory_space<vmem>>, vector<32x32xbf16>
    %cst_15 = arith.constant dense<0.000000e+00> : vector<128x32xf32>
    %17 = tpu.matmul %1, %16, %cst_15 {dimension_numbers = #tpu.dot_dimension_numbers<[1], [0], [0], [1], [0, 0, 1, 1], [], []>} : vector<128x32xbf16>, vector<32x32xbf16>, vector<128x32xf32> -> vector<128x32xf32>
    %c1 = arith.constant 1 : index
    %c0_16 = arith.constant 0 : index
    %18 = vector.load %arg5[%c1, %c0_16] : memref<3x32xf32, #tpu.memory_space<vmem>>, vector<1x32xf32>
    %19 = vector.broadcast %18 : vector<1x32xf32> to vector<128x32xf32>
    %20 = arith.addf %17, %19 : vector<128x32xf32>
    %21 = arith.truncf %20 : vector<128x32xf32> to vector<128x32xbf16>
    %c0_17 = arith.constant 0 : index
    %c32 = arith.constant 32 : index
    %22 = vector.load %arg9[%c0_17, %c32] : memref<128x96xbf16, #tpu.memory_space<vmem>>, vector<128x32xbf16>
    tpu.vector_store %arg9[%c0_17, %c32], %21 {strides = array<i32>} : memref<128x96xbf16, #tpu.memory_space<vmem>>, vector<128x32xbf16>,
    %23 = vector.extract_strided_slice %4 {offsets = [0, 4], sizes = [128, 4], strides = [1, 1]} : vector<128x8xbf16> to vector<128x4xbf16>
    %c0_18 = arith.constant 0 : index
    %c0_19 = arith.constant 0 : index
    %24 = vector.load %arg8[%c0_18, %c0_19] : memref<4x32xbf16, #tpu.memory_space<vmem>>, vector<4x32xbf16>
    %cst_20 = arith.constant dense<0.000000e+00> : vector<128x32xf32>
    %25 = tpu.matmul %23, %24, %cst_20 {dimension_numbers = #tpu.dot_dimension_numbers<[1], [0], [0], [1], [0, 0, 1, 1], [], []>} : vector<128x4xbf16>, vector<4x32xbf16>, vector<128x32xf32> -> vector<128x32xf32>
    %c0_21 = arith.constant 0 : index
    %c0_22 = arith.constant 0 : index
    %26 = vector.load %arg4[%c0_21, %c0_22] : memref<32x32xbf16, #tpu.memory_space<vmem>>, vector<32x32xbf16>
    %cst_23 = arith.constant dense<0.000000e+00> : vector<128x32xf32>
    %27 = tpu.matmul %1, %26, %cst_23 {dimension_numbers = #tpu.dot_dimension_numbers<[1], [0], [0], [1], [0, 0, 1, 1], [], []>} : vector<128x32xbf16>, vector<32x32xbf16>, vector<128x32xf32> -> vector<128x32xf32>
    %c2 = arith.constant 2 : index
    %c0_24 = arith.constant 0 : index
    %28 = vector.load %arg5[%c2, %c0_24] : memref<3x32xf32, #tpu.memory_space<vmem>>, vector<1x32xf32>
    %29 = vector.broadcast %28 : vector<1x32xf32> to vector<128x32xf32>
    %30 = arith.addf %27, %29 : vector<128x32xf32>
    %31 = arith.addf %30, %25 : vector<128x32xf32>
    %32 = arith.truncf %31 : vector<128x32xf32> to vector<128x32xbf16>
    %c0_25 = arith.constant 0 : index
    %c64 = arith.constant 64 : index
    %33 = vector.load %arg9[%c0_25, %c64] : memref<128x96xbf16, #tpu.memory_space<vmem>>, vector<128x32xbf16>
    tpu.vector_store %arg9[%c0_25, %c64], %32 {strides = array<i32>} : memref<128x96xbf16, #tpu.memory_space<vmem>>, vector<128x32xbf16>,
    return
  }
  func.func @transform_0(%arg0: i32) -> (i32, i32) {
    %c0_i32 = arith.constant 0 : i32
    %c0_i32_0 = arith.constant 0 : i32
    return %arg0, %c0_i32 : i32, i32
  }
  func.func @transform_1(%arg0: i32) -> (i32, i32) {
    %c0_i32 = arith.constant 0 : i32
    %c0_i32_0 = arith.constant 0 : i32
    %c0_i32_1 = arith.constant 0 : i32
    return %c0_i32, %c0_i32_0 : i32, i32
  }
  func.func @transform_2(%arg0: i32) -> (i32, i32) {
    %c0_i32 = arith.constant 0 : i32
    %c0_i32_0 = arith.constant 0 : i32
    %c0_i32_1 = arith.constant 0 : i32
    return %c0_i32, %c0_i32_0 : i32, i32
  }
  func.func @transform_3(%arg0: i32) -> (i32, i32) {
    %c0_i32 = arith.constant 0 : i32
    %c0_i32_0 = arith.constant 0 : i32
    %c0_i32_1 = arith.constant 0 : i32
    return %c0_i32, %c0_i32_0 : i32, i32
  }
  func.func @transform_4(%arg0: i32) -> (i32, i32) {
    %c0_i32 = arith.constant 0 : i32
    %c0_i32_0 = arith.constant 0 : i32
    %c0_i32_1 = arith.constant 0 : i32
    return %c0_i32, %c0_i32_0 : i32, i32
  }
  func.func @transform_5(%arg0: i32) -> (i32, i32) {
    %c0_i32 = arith.constant 0 : i32
    %c0_i32_0 = arith.constant 0 : i32
    %c0_i32_1 = arith.constant 0 : i32
    return %c0_i32, %c0_i32_0 : i32, i32
  }
  func.func @transform_6(%arg0: i32) -> (i32, i32) {
    %c0_i32 = arith.constant 0 : i32
    %c0_i32_0 = arith.constant 0 : i32
    %c0_i32_1 = arith.constant 0 : i32
    return %c0_i32, %c0_i32_0 : i32, i32
  }
  func.func @transform_7(%arg0: i32) -> (i32, i32) {
    %c0_i32 = arith.constant 0 : i32
    %c0_i32_0 = arith.constant 0 : i32
    %c0_i32_1 = arith.constant 0 : i32
    return %c0_i32, %c0_i32_0 : i32, i32
  }
  func.func @transform_8(%arg0: i32) -> (i32, i32) {
    %c0_i32 = arith.constant 0 : i32
    %c0_i32_0 = arith.constant 0 : i32
    return %arg0, %c0_i32 : i32, i32
  }
}

module attributes {stable_mosaic.version = 11 : i64} {
  func.func @_lora_qkv_kernel(%arg0: i32, %arg1: memref<128x32xf32, #tpu.memory_space<vmem>>, %arg2: memref<32x32xbf16, #tpu.memory_space<vmem>>, %arg3: memref<32x32xbf16, #tpu.memory_space<vmem>>, %arg4: memref<32x32xbf16, #tpu.memory_space<vmem>>, %arg5: memref<3x32xf32, #tpu.memory_space<vmem>>, %arg6: memref<32x8xbf16, #tpu.memory_space<vmem>>, %arg7: memref<4x32xbf16, #tpu.memory_space<vmem>>, %arg8: memref<4x32xbf16, #tpu.memory_space<vmem>>, %arg9: memref<128x96xbf16, #tpu.memory_space<vmem>>) attributes {dimension_semantics = [#tpu.dimension_semantics<parallel>], iteration_bounds = array<i64: 1>, scalar_prefetch = 0 : i64, scratch_operands = 0 : i64, tpu.core_type = #tpu.core_type<tc>, window_params = [{transform_indices = @transform_0, window_bounds = array<i64: 128, 32>}, {pipeline_mode = #tpu.pipeline_mode<synchronous>, transform_indices = @transform_1, window_bounds = array<i64: 32, 32>}, {pipeline_mode = #tpu.pipeline_mode<synchronous>, transform_indices = @transform_2, window_bounds = array<i64: 32, 32>}, {pipeline_mode = #tpu.pipeline_mode<synchronous>, transform_indices = @transform_3, window_bounds = array<i64: 32, 32>}, {pipeline_mode = #tpu.pipeline_mode<synchronous>, transform_indices = @transform_4, window_bounds = array<i64: 3, 32>}, {pipeline_mode = #tpu.pipeline_mode<synchronous>, transform_indices = @transform_5, window_bounds = array<i64: 32, 8>}, {pipeline_mode = #tpu.pipeline_mode<synchronous>, transform_indices = @transform_6, window_bounds = array<i64: 4, 32>}, {pipeline_mode = #tpu.pipeline_mode<synchronous>, transform_indices = @transform_7, window_bounds = array<i64: 4, 32>}, {transform_indices = @transform_8, window_bounds = array<i64: 128, 96>}]} {
    %c0 = arith.constant 0 : index
    %c0_0 = arith.constant 0 : index
    %0 = vector.load %arg1[%c0, %c0_0] : memref<128x32xf32, #tpu.memory_space<vmem>>, vector<128x32xf32>
    %1 = arith.truncf %0 : vector<128x32xf32> to vector<128x32xbf16>
    %c0_1 = arith.constant 0 : index
    %c0_2 = arith.constant 0 : index
    %2 = vector.load %arg6[%c0_1, %c0_2] : memref<32x8xbf16, #tpu.memory_space<vmem>>, vector<32x8xbf16>
    %cst = arith.constant dense<0.000000e+00> : vector<128x8xf32>
    %3 = tpu.matmul %1, %2, %cst {dimension_numbers = #tpu.dot_dimension_numbers<[1], [0], [0], [1], [0, 0, 1, 1], [], []>} : vector<128x32xbf16>, vector<32x8xbf16>, vector<128x8xf32> -> vector<128x8xf32>
    %4 = arith.truncf %3 : vector<128x8xf32> to vector<128x8xbf16>
    %5 = vector.extract_strided_slice %4 {offsets = [0, 0], sizes = [128, 4], strides = [1, 1]} : vector<128x8xbf16> to vector<128x4xbf16>
    %c0_3 = arith.constant 0 : index
    %c0_4 = arith.constant 0 : index
    %6 = vector.load %arg7[%c0_3, %c0_4] : memref<4x32xbf16, #tpu.memory_space<vmem>>, vector<4x32xbf16>
    %cst_5 = arith.constant dense<0.000000e+00> : vector<128x32xf32>
    %7 = tpu.matmul %5, %6, %cst_5 {dimension_numbers = #tpu.dot_dimension_numbers<[1], [0], [0], [1], [0, 0, 1, 1], [], []>} : vector<128x4xbf16>, vector<4x32xbf16>, vector<128x32xf32> -> vector<128x32xf32>
    %c0_6 = arith.constant 0 : index
    %c0_7 = arith.constant 0 : index
    %8 = vector.load %arg2[%c0_6, %c0_7] : memref<32x32xbf16, #tpu.memory_space<vmem>>, vector<32x32xbf16>
    %cst_8 = arith.constant dense<0.000000e+00> : vector<128x32xf32>
    %9 = tpu.matmul %1, %8, %cst_8 {dimension_numbers = #tpu.dot_dimension_numbers<[1], [0], [0], [1], [0, 0, 1, 1], [], []>} : vector<128x32xbf16>, vector<32x32xbf16>, vector<128x32xf32> -> vector<128x32xf32>
    %c0_9 = arith.constant 0 : index
    %c0_10 = arith.constant 0 : index
    %10 = vector.load %arg5[%c0_9, %c0_10] : memref<3x32xf32, #tpu.memory_space<vmem>>, vector<1x32xf32>
    %11 = vector.broadcast %10 : vector<1x32xf32> to vector<128x32xf32>
    %12 = arith.addf %9, %11 : vector<128x32xf32>
    %13 = arith.addf %12, %7 : vector<128x32xf32>
    %14 = arith.truncf %13 : vector<128x32xf32> to vector<128x32xbf16>
    %c0_11 = arith.constant 0 : index
    %c0_12 = arith.constant 0 : index
    %15 = vector.load %arg9[%c0_11, %c0_12] : memref<128x96xbf16, #tpu.memory_space<vmem>>, vector<128x32xbf16>
    tpu.vector_store %arg9[%c0_11, %c0_12], %14 {strides = array<i32>} : memref<128x96xbf16, #tpu.memory_space<vmem>>, vector<128x32xbf16>,
    %c0_13 = arith.constant 0 : index
    %c0_14 = arith.constant 0 : index
    %16 = vector.load %arg3[%c0_13, %c0_14] : memref<32x32xbf16, #tpu.memory_space<vmem>>, vector<32x32xbf16>
    %cst_15 = arith.constant dense<0.000000e+00> : vector<128x32xf32>
    %17 = tpu.matmul %1, %16, %cst_15 {dimension_numbers = #tpu.dot_dimension_numbers<[1], [0], [0], [1], [0, 0, 1, 1], [], []>} : vector<128x32xbf16>, vector<32x32xbf16>, vector<128x32xf32> -> vector<128x32xf32>
    %c1 = arith.constant 1 : index
    %c0_16 = arith.constant 0 : index
    %18 = vector.load %arg5[%c1, %c0_16] : memref<3x32xf32, #tpu.memory_space<vmem>>, vector<1x32xf32>
    %19 = vector.broadcast %18 : vector<1x32xf32> to vector<128x32xf32>
    %20 = arith.addf %17, %19 : vector<128x32xf32>
    %21 = arith.truncf %20 : vector<128x32xf32> to vector<128x32xbf16>
    %c0_17 = arith.constant 0 : index
    %c32 = arith.constant 32 : index
    %22 = vector.load %arg9[%c0_17, %c32] : memref<128x96xbf16, #tpu.memory_space<vmem>>, vector<128x32xbf16>
    tpu.vector_store %arg9[%c0_17, %c32], %21 {strides = array<i32>} : memref<128x96xbf16, #tpu.memory_space<vmem>>, vector<128x32xbf16>,
    %23 = vector.extract_strided_slice %4 {offsets = [0, 4], sizes = [128, 4], strides = [1, 1]} : vector<128x8xbf16> to vector<128x4xbf16>
    %c0_18 = arith.constant 0 : index
    %c0_19 = arith.constant 0 : index
    %24 = vector.load %arg8[%c0_18, %c0_19] : memref<4x32xbf16, #tpu.memory_space<vmem>>, vector<4x32xbf16>
    %cst_20 = arith.constant dense<0.000000e+00> : vector<128x32xf32>
    %25 = tpu.matmul %23, %24, %cst_20 {dimension_numbers = #tpu.dot_dimension_numbers<[1], [0], [0], [1], [0, 0, 1, 1], [], []>} : vector<128x4xbf16>, vector<4x32xbf16>, vector<128x32xf32> -> vector<128x32xf32>
    %c0_21 = arith.constant 0 : index
    %c0_22 = arith.constant 0 : index
    %26 = vector.load %arg4[%c0_21, %c0_22] : memref<32x32xbf16, #tpu.memory_space<vmem>>, vector<32x32xbf16>
    %cst_23 = arith.constant dense<0.000000e+00> : vector<128x32xf32>
    %27 = tpu.matmul %1, %26, %cst_23 {dimension_numbers = #tpu.dot_dimension_numbers<[1], [0], [0], [1], [0, 0, 1, 1], [], []>} : vector<128x32xbf16>, vector<32x32xbf16>, vector<128x32xf32> -> vector<128x32xf32>
    %c2 = arith.constant 2 : index
    %c0_24 = arith.constant 0 : index
    %28 = vector.load %arg5[%c2, %c0_24] : memref<3x32xf32, #tpu.memory_space<vmem>>, vector<1x32xf32>
    %29 = vector.broadcast %28 : vector<1x32xf32> to vector<128x32xf32>
    %30 = arith.addf %27, %29 : vector<128x32xf32>
    %31 = arith.addf %30, %25 : vector<128x32xf32>
    %32 = arith.truncf %31 : vector<128x32xf32> to vector<128x32xbf16>
    %c0_25 = arith.constant 0 : index
    %c64 = arith.constant 64 : index
    %33 = vector.load %arg9[%c0_25, %c64] : memref<128x96xbf16, #tpu.memory_space<vmem>>, vector<128x32xbf16>
    tpu.vector_store %arg9[%c0_25, %c64], %32 {strides = array<i32>} : memref<128x96xbf16, #tpu.memory_space<vmem>>, vector<128x32xbf16>,
    return
  }
  func.func @transform_0(%arg0: i32) -> (i32, i32) {
    %c0_i32 = arith.constant 0 : i32
    %c0_i32_0 = arith.constant 0 : i32
    return %arg0, %c0_i32 : i32, i32
  }
  func.func @transform_1(%arg0: i32) -> (i32, i32) {
    %c0_i32 = arith.constant 0 : i32
    %c0_i32_0 = arith.constant 0 : i32
    %c0_i32_1 = arith.constant 0 : i32
    return %c0_i32, %c0_i32_0 : i32, i32
  }
  func.func @transform_2(%arg0: i32) -> (i32, i32) {
    %c0_i32 = arith.constant 0 : i32
    %c0_i32_0 = arith.constant 0 : i32
    %c0_i32_1 = arith.constant 0 : i32
    return %c0_i32, %c0_i32_0 : i32, i32
  }
  func.func @transform_3(%arg0: i32) -> (i32, i32) {
    %c0_i32 = arith.constant 0 : i32
    %c0_i32_0 = arith.constant 0 : i32
    %c0_i32_1 = arith.constant 0 : i32
    return %c0_i32, %c0_i32_0 : i32, i32
  }
  func.func @transform_4(%arg0: i32) -> (i32, i32) {
    %c0_i32 = arith.constant 0 : i32
    %c0_i32_0 = arith.constant 0 : i32
    %c0_i32_1 = arith.constant 0 : i32
    return %c0_i32, %c0_i32_0 : i32, i32
  }
  func.func @transform_5(%arg0: i32) -> (i32, i32) {
    %c0_i32 = arith.constant 0 : i32
    %c0_i32_0 = arith.constant 0 : i32
    %c0_i32_1 = arith.constant 0 : i32
    return %c0_i32, %c0_i32_0 : i32, i32
  }
  func.func @transform_6(%arg0: i32) -> (i32, i32) {
    %c0_i32 = arith.constant 0 : i32
    %c0_i32_0 = arith.constant 0 : i32
    %c0_i32_1 = arith.constant 0 : i32
    return %c0_i32, %c0_i32_0 : i32, i32
  }
  func.func @transform_7(%arg0: i32) -> (i32, i32) {
    %c0_i32 = arith.constant 0 : i32
    %c0_i32_0 = arith.constant 0 : i32
    %c0_i32_1 = arith.constant 0 : i32
    return %c0_i32, %c0_i32_0 : i32, i32
  }
  func.func @transform_8(%arg0: i32) -> (i32, i32) {
    %c0_i32 = arith.constant 0 : i32
    %c0_i32_0 = arith.constant 0 : i32
    return %arg0, %c0_i32 : i32, i32
  }
}

</mosaic_0001>

<llo_original>
// kernel: tpu_custom_call.1
$region0: #{tpu_custom_call.1}
  #allocation0 [shape = 'u32[]', space=smem, size = 0x4, offset = 0x4, fixed_abs, tag = 'smem constant byte address 0x4 - core index']
  #allocation1 [shape = 'u32[144,128]{1,0:T(1,128)}', space=vmem, size = 0x12000, scoped, tag = 'internal scratch']
  %s0 = inlined_call_operand.vmem [shape: f32[128,32], index: 0, kind: input, shape index: {}]
  %s1 = inlined_call_operand.vmem [shape: bf16[32,32], index: 1, kind: input, shape index: {}]
  %s2 = inlined_call_operand.vmem [shape: bf16[32,32], index: 2, kind: input, shape index: {}]
  %s3 = inlined_call_operand.vmem [shape: bf16[32,32], index: 3, kind: input, shape index: {}]
  %s4 = inlined_call_operand.vmem [shape: f32[3,32], index: 4, kind: input, shape index: {}]
  %s5 = inlined_call_operand.vmem [shape: bf16[32,8], index: 5, kind: input, shape index: {}]
  %s6 = inlined_call_operand.vmem [shape: bf16[4,32], index: 6, kind: input, shape index: {}]
  %s7 = inlined_call_operand.vmem [shape: bf16[4,32], index: 7, kind: input, shape index: {}]
  %s8 = inlined_call_operand.vmem [shape: bf16[128,96], index: 8, kind: output, shape index: {}]
  %s9 = sld [smem:[#allocation0]]
  $region42: #{tpu_custom_call.1} parent=0
    _
  %s11 = ssub.s32 1, %s9
  %s12 = scalar_select 0, %s11, %s9
  // Predicated region
  $region2: #{tpu_custom_call.1} parent=0 // pred_check
    _
  $region3: #{tpu_custom_call.1} parent=0 // pred_check_branch
    %14 = sbr.rel (0) target = $region5
  $region4: #{tpu_custom_call.1} parent=0 // pred_region
    _
  $region5: #{tpu_custom_call.1} parent=0 // pred_fallthru
    _
  // Predicated region
  $region6: #{tpu_custom_call.1} parent=0 // pred_check
    _
  $region7: #{tpu_custom_call.1} parent=0 // pred_check_branch
    %16 = sbr.rel (0) target = $region9
  $region8: #{tpu_custom_call.1} parent=0 // pred_region
    _
  $region9: #{tpu_custom_call.1} parent=0 // pred_fallthru
    _
  // Predicated region
  $region10: #{tpu_custom_call.1} parent=0 // pred_check
    _
  $region11: #{tpu_custom_call.1} parent=0 // pred_check_branch
    %18 = sbr.rel (0) target = $region13
  $region12: #{tpu_custom_call.1} parent=0 // pred_region
    _
  $region13: #{tpu_custom_call.1} parent=0 // pred_fallthru
    _
  // Predicated region
  $region14: #{tpu_custom_call.1} parent=0 // pred_check
    _
  $region15: #{tpu_custom_call.1} parent=0 // pred_check_branch
    %20 = sbr.rel (0) target = $region17
  $region16: #{tpu_custom_call.1} parent=0 // pred_region
    _
  $region17: #{tpu_custom_call.1} parent=0 // pred_fallthru
    _
  // Predicated region
  $region18: #{tpu_custom_call.1} parent=0 // pred_check
    _
  $region19: #{tpu_custom_call.1} parent=0 // pred_check_branch
    %22 = sbr.rel (0) target = $region21
  $region20: #{tpu_custom_call.1} parent=0 // pred_region
    _
  $region21: #{tpu_custom_call.1} parent=0 // pred_fallthru
    _
  // Predicated region
  $region22: #{tpu_custom_call.1} parent=0 // pred_check
    _
  $region23: #{tpu_custom_call.1} parent=0 // pred_check_branch
    %24 = sbr.rel (0) target = $region25
  $region24: #{tpu_custom_call.1} parent=0 // pred_region
    _
  $region25: #{tpu_custom_call.1} parent=0 // pred_fallthru
    _
  // Predicated region
  $region26: #{tpu_custom_call.1} parent=0 // pred_check
    _
  $region27: #{tpu_custom_call.1} parent=0 // pred_check_branch
    %26 = sbr.rel (0) target = $region29
  $region28: #{tpu_custom_call.1} parent=0 // pred_region
    _
  $region29: #{tpu_custom_call.1} parent=0 // pred_fallthru
    _
  // Predicated region
  $region30: #{tpu_custom_call.1} parent=0 // pred_check
    _
  $region31: #{tpu_custom_call.1} parent=0 // pred_check_branch
    %28 = sbr.rel (0) target = $region33
  $region32: #{tpu_custom_call.1} parent=0 // pred_region
    _
  $region33: #{tpu_custom_call.1} parent=0 // pred_fallthru
    _
  %v30 = vld [vmem:[%s0] sm:$0xff]
  %v31 = vld [vmem:[%s0 + $0x8] sm:$0xff]
  %v32 = vld [vmem:[%s0 + $0x10] sm:$0xff]
  %v33 = vld [vmem:[%s0 + $0x18] sm:$0xff]
  %v34 = vld [vmem:[%s0 + $0x20] sm:$0xff]
  %v35 = vld [vmem:[%s0 + $0x28] sm:$0xff]
  %v36 = vld [vmem:[%s0 + $0x30] sm:$0xff]
  %v37 = vld [vmem:[%s0 + $0x38] sm:$0xff]
  %v38 = vld [vmem:[%s0 + $0x40] sm:$0xff]
  %v39 = vld [vmem:[%s0 + $0x48] sm:$0xff]
  %v40 = vld [vmem:[%s0 + $0x50] sm:$0xff]
  %v41 = vld [vmem:[%s0 + $0x58] sm:$0xff]
  %v42 = vld [vmem:[%s0 + $0x60] sm:$0xff]
  %v43 = vld [vmem:[%s0 + $0x68] sm:$0xff]
  %v44 = vld [vmem:[%s0 + $0x70] sm:$0xff]
  %v45 = vld [vmem:[%s0 + $0x78] sm:$0xff]
  %v46 = vpack.c.bf16 %v31, %v30
  %v47 = vpack.c.bf16 %v33, %v32
  %v48 = vpack.c.bf16 %v35, %v34
  %v49 = vpack.c.bf16 %v37, %v36
  %v50 = vpack.c.bf16 %v39, %v38
  %v51 = vpack.c.bf16 %v41, %v40
  %v52 = vpack.c.bf16 %v43, %v42
  %v53 = vpack.c.bf16 %v45, %v44
  %v54 = vld [vmem:[%s5] sm:$0xf]
  %v55 = vld [vmem:[%s5 + $0x4] sm:$0xf]
  %v56 = vld [vmem:[%s5 + $0x8] sm:$0xf]
  %v57 = vld [vmem:[%s5 + $0xc] sm:$0xf]
  %v62 = vunpack.c.l.b16 %v54
  %v63 = vunpack.c.l.b16 %v55
  %v64 = vunpack.c.l.b16 %v56
  %v65 = vunpack.c.l.b16 %v57
  %v66 = vpack.c.b16 %v63, %v62
  %v67 = vpack.c.b16 %v65, %v64
  %vm70 = vcmask 261120
  %v72 = vsel %vm70, %v46, 0
  %v75 = vsel %vm70, %v47, 0
  %v78 = vsel %vm70, %v48, 0
  %v81 = vsel %vm70, %v49, 0
  %v84 = vsel %vm70, %v50, 0
  %v87 = vsel %vm70, %v51, 0
  %v90 = vsel %vm70, %v52, 0
  %v93 = vsel %vm70, %v53, 0
  %95 = vmatprep.subr.bf16.mxu0 0
  %96 = vmatpush1.bf16.msra.mxu0 %v66
  %97 = vmatprep.subr.bf16.mxu0 0
  %98 = vmatpush1.bf16.msra.mxu0 %v67
  %99 = vmatprep.subr.bf16.mxu0 0
  %100 = vmatpush1.bf16.msra.mxu0 0
  %101 = vmatprep.subr.bf16.mxu0 0
  %102 = vmatpush1.bf16.msra.mxu0 0
  %103 = vmatprep.subr.bf16.mxu0 0
  %104 = vmatpush1.bf16.msra.mxu0 0
  %105 = vmatprep.subr.bf16.mxu0 0
  %106 = vmatpush1.bf16.msra.mxu0 0
  %107 = vmatprep.subr.bf16.mxu0 0
  %108 = vmatpush1.bf16.msra.mxu0 0
  %109 = vmatprep.subr.bf16.mxu0 0
  %110 = vmatpush1.bf16.msra.mxu0 0
  %111 = vmatprep.subr.bf16.mxu0 0
  %112 = vmatpush1.bf16.msra.mxu0 0
  %113 = vmatprep.subr.bf16.mxu0 0
  %114 = vmatpush1.bf16.msra.mxu0 0
  %115 = vmatprep.subr.bf16.mxu0 0
  %116 = vmatpush1.bf16.msra.mxu0 0
  %117 = vmatprep.subr.bf16.mxu0 0
  %118 = vmatpush1.bf16.msra.mxu0 0
  %119 = vmatprep.subr.bf16.mxu0 0
  %120 = vmatpush1.bf16.msra.mxu0 0
  %121 = vmatprep.subr.bf16.mxu0 0
  %122 = vmatpush1.bf16.msra.mxu0 0
  %123 = vmatprep.subr.bf16.mxu0 0
  %124 = vmatpush1.bf16.msra.mxu0 0
  %125 = vmatprep.subr.bf16.mxu0 0
  %126 = vmatpush1.bf16.msra.mxu0 0
  %127 = vmatprep.mubr.bf16.mxu0 0
  %128 = vmatmul.mubr.bf16.gmra.mrb[0].mxu0 %v72
  %v129 = vpop.f32.mrb[0].mxu0
  %v130 = vadd.f32 0.0, %v129
  %v131 = vpop.f32.mrb[0].mxu0
  %v132 = vpop.f32.mrb[0].mxu0
  %v133 = vadd.f32 0.0, %v132
  %v134 = vpop.f32.mrb[0].mxu0
  %135 = vmatprep.mubr.bf16.mxu0 0
  %136 = vmatmul.mubr.bf16.gmra.mrb[0].mxu0 %v75
  %v137 = vpop.f32.mrb[0].mxu0
  %v138 = vadd.f32 0.0, %v137
  %v139 = vpop.f32.mrb[0].mxu0
  %v140 = vpop.f32.mrb[0].mxu0
  %v141 = vadd.f32 0.0, %v140
  %v142 = vpop.f32.mrb[0].mxu0
  %143 = vmatprep.mubr.bf16.mxu0 0
  %144 = vmatmul.mubr.bf16.gmra.mrb[0].mxu0 %v78
  %v145 = vpop.f32.mrb[0].mxu0
  %v146 = vadd.f32 0.0, %v145
  %v147 = vpop.f32.mrb[0].mxu0
  %v148 = vpop.f32.mrb[0].mxu0
  %v149 = vadd.f32 0.0, %v148
  %v150 = vpop.f32.mrb[0].mxu0
  %151 = vmatprep.mubr.bf16.mxu0 0
  %152 = vmatmul.mubr.bf16.gmra.mrb[0].mxu0 %v81
  %v153 = vpop.f32.mrb[0].mxu0
  %v154 = vadd.f32 0.0, %v153
  %v155 = vpop.f32.mrb[0].mxu0
  %v156 = vpop.f32.mrb[0].mxu0
  %v157 = vadd.f32 0.0, %v156
  %v158 = vpop.f32.mrb[0].mxu0
  %159 = vmatprep.mubr.bf16.mxu0 0
  %160 = vmatmul.mubr.bf16.gmra.mrb[0].mxu0 %v84
  %v161 = vpop.f32.mrb[0].mxu0
  %v162 = vadd.f32 0.0, %v161
  %v163 = vpop.f32.mrb[0].mxu0
  %v164 = vpop.f32.mrb[0].mxu0
  %v165 = vadd.f32 0.0, %v164
  %v166 = vpop.f32.mrb[0].mxu0
  %167 = vmatprep.mubr.bf16.mxu0 0
  %168 = vmatmul.mubr.bf16.gmra.mrb[0].mxu0 %v87
  %v169 = vpop.f32.mrb[0].mxu0
  %v170 = vadd.f32 0.0, %v169
  %v171 = vpop.f32.mrb[0].mxu0
  %v172 = vpop.f32.mrb[0].mxu0
  %v173 = vadd.f32 0.0, %v172
  %v174 = vpop.f32.mrb[0].mxu0
  %175 = vmatprep.mubr.bf16.mxu0 0
  %176 = vmatmul.mubr.bf16.gmra.mrb[0].mxu0 %v90
  %v177 = vpop.f32.mrb[0].mxu0
  %v178 = vadd.f32 0.0, %v177
  %v179 = vpop.f32.mrb[0].mxu0
  %v180 = vpop.f32.mrb[0].mxu0
  %v181 = vadd.f32 0.0, %v180
  %v182 = vpop.f32.mrb[0].mxu0
  %183 = vmatprep.mubr.bf16.mxu0 0
  %184 = vmatmul.mubr.bf16.gmra.mrb[0].mxu0 %v93
  %v185 = vpop.f32.mrb[0].mxu0
  %v186 = vadd.f32 0.0, %v185
  %v187 = vpop.f32.mrb[0].mxu0
  %v188 = vpop.f32.mrb[0].mxu0
  %v189 = vadd.f32 0.0, %v188
  %v190 = vpop.f32.mrb[0].mxu0
  %191 = vdwg.mxu0
  %v192 = vpack.c.bf16 %v133, %v130
  %v193 = vpack.c.bf16 %v141, %v138
  %v194 = vpack.c.bf16 %v149, %v146
  %v195 = vpack.c.bf16 %v157, %v154
  %v196 = vpack.c.bf16 %v165, %v162
  %v197 = vpack.c.bf16 %v173, %v170
  %v198 = vpack.c.bf16 %v181, %v178
  %v199 = vpack.c.bf16 %v189, %v186
  %v200 = vld [vmem:[%s6] sm:$0x3]
  %vm201 = vcmask 31744
  %v203 = vsel %vm201, %v192, 0
  %v206 = vsel %vm201, %v193, 0
  %v209 = vsel %vm201, %v194, 0
  %v212 = vsel %vm201, %v195, 0
  %v215 = vsel %vm201, %v196, 0
  %v218 = vsel %vm201, %v197, 0
  %v221 = vsel %vm201, %v198, 0
  %v224 = vsel %vm201, %v199, 0
  %vm226 = vcmask 1041408
  %v228 = vsel %vm226, %v200, 0
  %230 = vmatprep.subr.bf16.mxu0 0
  %231 = vmatpush1.bf16.msra.mxu0 %v228
  %232 = vmatprep.subr.bf16.mxu0 0
  %233 = vmatpush1.bf16.msra.mxu0 0
  %234 = vmatprep.subr.bf16.mxu0 0
  %235 = vmatpush1.bf16.msra.mxu0 0
  %236 = vmatprep.subr.bf16.mxu0 0
  %237 = vmatpush1.bf16.msra.mxu0 0
  %238 = vmatprep.subr.bf16.mxu0 0
  %239 = vmatpush1.bf16.msra.mxu0 0
  %240 = vmatprep.subr.bf16.mxu0 0
  %241 = vmatpush1.bf16.msra.mxu0 0
  %242 = vmatprep.subr.bf16.mxu0 0
  %243 = vmatpush1.bf16.msra.mxu0 0
  %244 = vmatprep.subr.bf16.mxu0 0
  %245 = vmatpush1.bf16.msra.mxu0 0
  %246 = vmatprep.subr.bf16.mxu0 0
  %247 = vmatpush1.bf16.msra.mxu0 0
  %248 = vmatprep.subr.bf16.mxu0 0
  %249 = vmatpush1.bf16.msra.mxu0 0
  %250 = vmatprep.subr.bf16.mxu0 0
  %251 = vmatpush1.bf16.msra.mxu0 0
  %252 = vmatprep.subr.bf16.mxu0 0
  %253 = vmatpush1.bf16.msra.mxu0 0
  %254 = vmatprep.subr.bf16.mxu0 0
  %255 = vmatpush1.bf16.msra.mxu0 0
  %256 = vmatprep.subr.bf16.mxu0 0
  %257 = vmatpush1.bf16.msra.mxu0 0
  %258 = vmatprep.subr.bf16.mxu0 0
  %259 = vmatpush1.bf16.msra.mxu0 0
  %260 = vmatprep.subr.bf16.mxu0 0
  %261 = vmatpush1.bf16.msra.mxu0 0
  %262 = vmatprep.mubr.bf16.mxu0 0
  %263 = vmatmul.mubr.bf16.gmra.mrb[0].mxu0 %v203
  %v264 = vpop.f32.mrb[0].mxu0
  %v265 = vadd.f32 0.0, %v264
  %v266 = vpop.f32.mrb[0].mxu0
  %v267 = vpop.f32.mrb[0].mxu0
  %v268 = vadd.f32 0.0, %v267
  %v269 = vpop.f32.mrb[0].mxu0
  %270 = vmatprep.mubr.bf16.mxu0 0
  %271 = vmatmul.mubr.bf16.gmra.mrb[0].mxu0 %v206
  %v272 = vpop.f32.mrb[0].mxu0
  %v273 = vadd.f32 0.0, %v272
  %v274 = vpop.f32.mrb[0].mxu0
  %v275 = vpop.f32.mrb[0].mxu0
  %v276 = vadd.f32 0.0, %v275
  %v277 = vpop.f32.mrb[0].mxu0
  %278 = vmatprep.mubr.bf16.mxu0 0
  %279 = vmatmul.mubr.bf16.gmra.mrb[0].mxu0 %v209
  %v280 = vpop.f32.mrb[0].mxu0
  %v281 = vadd.f32 0.0, %v280
  %v282 = vpop.f32.mrb[0].mxu0
  %v283 = vpop.f32.mrb[0].mxu0
  %v284 = vadd.f32 0.0, %v283
  %v285 = vpop.f32.mrb[0].mxu0
  %286 = vmatprep.mubr.bf16.mxu0 0
  %287 = vmatmul.mubr.bf16.gmra.mrb[0].mxu0 %v212
  %v288 = vpop.f32.mrb[0].mxu0
  %v289 = vadd.f32 0.0, %v288
  %v290 = vpop.f32.mrb[0].mxu0
  %v291 = vpop.f32.mrb[0].mxu0
  %v292 = vadd.f32 0.0, %v291
  %v293 = vpop.f32.mrb[0].mxu0
  %294 = vmatprep.mubr.bf16.mxu0 0
  %295 = vmatmul.mubr.bf16.gmra.mrb[0].mxu0 %v215
  %v296 = vpop.f32.mrb[0].mxu0
  %v297 = vadd.f32 0.0, %v296
  %v298 = vpop.f32.mrb[0].mxu0
  %v299 = vpop.f32.mrb[0].mxu0
  %v300 = vadd.f32 0.0, %v299
  %v301 = vpop.f32.mrb[0].mxu0
  %302 = vmatprep.mubr.bf16.mxu0 0
  %303 = vmatmul.mubr.bf16.gmra.mrb[0].mxu0 %v218
  %v304 = vpop.f32.mrb[0].mxu0
  %v305 = vadd.f32 0.0, %v304
  %v306 = vpop.f32.mrb[0].mxu0
  %v307 = vpop.f32.mrb[0].mxu0
  %v308 = vadd.f32 0.0, %v307
  %v309 = vpop.f32.mrb[0].mxu0
  %310 = vmatprep.mubr.bf16.mxu0 0
  %311 = vmatmul.mubr.bf16.gmra.mrb[0].mxu0 %v221
  %v312 = vpop.f32.mrb[0].mxu0
  %v313 = vadd.f32 0.0, %v312
  %v314 = vpop.f32.mrb[0].mxu0
  %v315 = vpop.f32.mrb[0].mxu0
  %v316 = vadd.f32 0.0, %v315
  %v317 = vpop.f32.mrb[0].mxu0
  %318 = vmatprep.mubr.bf16.mxu0 0
  %319 = vmatmul.mubr.bf16.gmra.mrb[0].mxu0 %v224
  %v320 = vpop.f32.mrb[0].mxu0
  %v321 = vadd.f32 0.0, %v320
  %v322 = vpop.f32.mrb[0].mxu0
  %v323 = vpop.f32.mrb[0].mxu0
  %v324 = vadd.f32 0.0, %v323
  %v325 = vpop.f32.mrb[0].mxu0
  %326 = vdwg.mxu0
  %v327 = vld [vmem:[%s1] sm:$0xf]
  %v328 = vld [vmem:[%s1 + $0x4] sm:$0xf]
  %v329 = vld [vmem:[%s1 + $0x8] sm:$0xf]
  %v330 = vld [vmem:[%s1 + $0xc] sm:$0xf]
  %v331 = vld [vmem:[%s4] sm:$0x1]
  %v332 = vlaneseq
  %v333 = vshrl.u32 %v332, 7
  %v334 = vsub.s32 0, %v333
  %v335 = vrot.slane %v331, %v334
  %v340 = vunpack.c.l.b16 %v327
  %v341 = vunpack.c.l.b16 %v328
  %v342 = vunpack.c.l.b16 %v329
  %v343 = vunpack.c.l.b16 %v330
  %v344 = vpack.c.b16 %v341, %v340
  %v345 = vpack.c.b16 %v343, %v342
  %348 = vmatprep.subr.bf16.mxu0 0
  %349 = vmatpush1.bf16.msra.mxu0 %v344
  %350 = vmatprep.subr.bf16.mxu0 0
  %351 = vmatpush1.bf16.msra.mxu0 %v345
  %352 = vmatprep.subr.bf16.mxu0 0
  %353 = vmatpush1.bf16.msra.mxu0 0
  %354 = vmatprep.subr.bf16.mxu0 0
  %355 = vmatpush1.bf16.msra.mxu0 0
  %356 = vmatprep.subr.bf16.mxu0 0
  %357 = vmatpush1.bf16.msra.mxu0 0
  %358 = vmatprep.subr.bf16.mxu0 0
  %359 = vmatpush1.bf16.msra.mxu0 0
  %360 = vmatprep.subr.bf16.mxu0 0
  %361 = vmatpush1.bf16.msra.mxu0 0
  %362 = vmatprep.subr.bf16.mxu0 0
  %363 = vmatpush1.bf16.msra.mxu0 0
  %364 = vmatprep.subr.bf16.mxu0 0
  %365 = vmatpush1.bf16.msra.mxu0 0
  %366 = vmatprep.subr.bf16.mxu0 0
  %367 = vmatpush1.bf16.msra.mxu0 0
  %368 = vmatprep.subr.bf16.mxu0 0
  %369 = vmatpush1.bf16.msra.mxu0 0
  %370 = vmatprep.subr.bf16.mxu0 0
  %371 = vmatpush1.bf16.msra.mxu0 0
  %372 = vmatprep.subr.bf16.mxu0 0
  %373 = vmatpush1.bf16.msra.mxu0 0
  %374 = vmatprep.subr.bf16.mxu0 0
  %375 = vmatpush1.bf16.msra.mxu0 0
  %376 = vmatprep.subr.bf16.mxu0 0
  %377 = vmatpush1.bf16.msra.mxu0 0
  %378 = vmatprep.subr.bf16.mxu0 0
  %379 = vmatpush1.bf16.msra.mxu0 0
  %380 = vmatprep.mubr.bf16.mxu0 0
  %381 = vmatmul.mubr.bf16.gmra.mrb[0].mxu0 %v72
  %v382 = vpop.f32.mrb[0].mxu0
  %v383 = vadd.f32 %v335, %v382
  %v384 = vpop.f32.mrb[0].mxu0
  %v385 = vpop.f32.mrb[0].mxu0
  %v386 = vadd.f32 %v335, %v385
  %v387 = vpop.f32.mrb[0].mxu0
  %388 = vmatprep.mubr.bf16.mxu0 0
  %389 = vmatmul.mubr.bf16.gmra.mrb[0].mxu0 %v75
  %v390 = vpop.f32.mrb[0].mxu0
  %v391 = vadd.f32 %v335, %v390
  %v392 = vpop.f32.mrb[0].mxu0
  %v393 = vpop.f32.mrb[0].mxu0
  %v394 = vadd.f32 %v335, %v393
  %v395 = vpop.f32.mrb[0].mxu0
  %396 = vmatprep.mubr.bf16.mxu0 0
  %397 = vmatmul.mubr.bf16.gmra.mrb[0].mxu0 %v78
  %v398 = vpop.f32.mrb[0].mxu0
  %v399 = vadd.f32 %v335, %v398
  %v400 = vpop.f32.mrb[0].mxu0
  %v401 = vpop.f32.mrb[0].mxu0
  %v402 = vadd.f32 %v335, %v401
  %v403 = vpop.f32.mrb[0].mxu0
  %404 = vmatprep.mubr.bf16.mxu0 0
  %405 = vmatmul.mubr.bf16.gmra.mrb[0].mxu0 %v81
  %v406 = vpop.f32.mrb[0].mxu0
  %v407 = vadd.f32 %v335, %v406
  %v408 = vpop.f32.mrb[0].mxu0
  %v409 = vpop.f32.mrb[0].mxu0
  %v410 = vadd.f32 %v335, %v409
  %v411 = vpop.f32.mrb[0].mxu0
  %412 = vmatprep.mubr.bf16.mxu0 0
  %413 = vmatmul.mubr.bf16.gmra.mrb[0].mxu0 %v84
  %v414 = vpop.f32.mrb[0].mxu0
  %v415 = vadd.f32 %v335, %v414
  %v416 = vpop.f32.mrb[0].mxu0
  %v417 = vpop.f32.mrb[0].mxu0
  %v418 = vadd.f32 %v335, %v417
  %v419 = vpop.f32.mrb[0].mxu0
  %420 = vmatprep.mubr.bf16.mxu0 0
  %421 = vmatmul.mubr.bf16.gmra.mrb[0].mxu0 %v87
  %v422 = vpop.f32.mrb[0].mxu0
  %v423 = vadd.f32 %v335, %v422
  %v424 = vpop.f32.mrb[0].mxu0
  %v425 = vpop.f32.mrb[0].mxu0
  %v426 = vadd.f32 %v335, %v425
  %v427 = vpop.f32.mrb[0].mxu0
  %428 = vmatprep.mubr.bf16.mxu0 0
  %429 = vmatmul.mubr.bf16.gmra.mrb[0].mxu0 %v90
  %v430 = vpop.f32.mrb[0].mxu0
  %v431 = vadd.f32 %v335, %v430
  %v432 = vpop.f32.mrb[0].mxu0
  %v433 = vpop.f32.mrb[0].mxu0
  %v434 = vadd.f32 %v335, %v433
  %v435 = vpop.f32.mrb[0].mxu0
  %436 = vmatprep.mubr.bf16.mxu0 0
  %437 = vmatmul.mubr.bf16.gmra.mrb[0].mxu0 %v93
  %v438 = vpop.f32.mrb[0].mxu0
  %v439 = vadd.f32 %v335, %v438
  %v440 = vpop.f32.mrb[0].mxu0
  %v441 = vpop.f32.mrb[0].mxu0
  %v442 = vadd.f32 %v335, %v441
  %v443 = vpop.f32.mrb[0].mxu0
  %444 = vdwg.mxu0
  %v445 = vadd.f32 %v383, %v265
  %v446 = vadd.f32 %v386, %v268
  %v447 = vadd.f32 %v391, %v273
  %v448 = vadd.f32 %v394, %v276
  %v449 = vadd.f32 %v399, %v281
  %v450 = vadd.f32 %v402, %v284
  %v451 = vadd.f32 %v407, %v289
  %v452 = vadd.f32 %v410, %v292
  %v453 = vadd.f32 %v415, %v297
  %v454 = vadd.f32 %v418, %v300
  %v455 = vadd.f32 %v423, %v305
  %v456 = vadd.f32 %v426, %v308
  %v457 = vadd.f32 %v431, %v313
  %v458 = vadd.f32 %v434, %v316
  %v459 = vadd.f32 %v439, %v321
  %v460 = vadd.f32 %v442, %v324
  %v461 = vpack.c.bf16 %v446, %v445
  %v462 = vpack.c.bf16 %v448, %v447
  %v463 = vpack.c.bf16 %v450, %v449
  %v464 = vpack.c.bf16 %v452, %v451
  %v465 = vpack.c.bf16 %v454, %v453
  %v466 = vpack.c.bf16 %v456, %v455
  %v467 = vpack.c.bf16 %v458, %v457
  %v468 = vpack.c.bf16 %v460, %v459
  %v477 = vunpack.c.l.b16 %v461
  %v478 = vunpack.c.h.b16 %v461
  %v479 = vunpack.c.l.b16 %v462
  %v480 = vunpack.c.h.b16 %v462
  %v481 = vunpack.c.l.b16 %v463
  %v482 = vunpack.c.h.b16 %v463
  %v483 = vunpack.c.l.b16 %v464
  %v484 = vunpack.c.h.b16 %v464
  %v485 = vunpack.c.l.b16 %v465
  %v486 = vunpack.c.h.b16 %v465
  %v487 = vunpack.c.l.b16 %v466
  %v488 = vunpack.c.h.b16 %v466
  %v489 = vunpack.c.l.b16 %v467
  %v490 = vunpack.c.h.b16 %v467
  %v491 = vunpack.c.l.b16 %v468
  %v492 = vunpack.c.h.b16 %v468
  %v493 = vpack.c.b16 %v477, %v477
  %v494 = vpack.c.b16 %v478, %v478
  %v495 = vpack.c.b16 %v479, %v479
  %v496 = vpack.c.b16 %v480, %v480
  %v497 = vpack.c.b16 %v481, %v481
  %v498 = vpack.c.b16 %v482, %v482
  %v499 = vpack.c.b16 %v483, %v483
  %v500 = vpack.c.b16 %v484, %v484
  %v501 = vpack.c.b16 %v485, %v485
  %v502 = vpack.c.b16 %v486, %v486
  %v503 = vpack.c.b16 %v487, %v487
  %v504 = vpack.c.b16 %v488, %v488
  %v505 = vpack.c.b16 %v489, %v489
  %v506 = vpack.c.b16 %v490, %v490
  %v507 = vpack.c.b16 %v491, %v491
  %v508 = vpack.c.b16 %v492, %v492
  %vm525 = vcmask 257024
  %526 = vst.msk [vmem:[%s8] sm:$0xf] %vm525, %v493
  %527 = vst.msk [vmem:[%s8 + $0x4] sm:$0xf] %vm525, %v494
  %528 = vst.msk [vmem:[%s8 + $0x8] sm:$0xf] %vm525, %v495
  %529 = vst.msk [vmem:[%s8 + $0xc] sm:$0xf] %vm525, %v496
  %530 = vst.msk [vmem:[%s8 + $0x10] sm:$0xf] %vm525, %v497
  %531 = vst.msk [vmem:[%s8 + $0x14] sm:$0xf] %vm525, %v498
  %532 = vst.msk [vmem:[%s8 + $0x18] sm:$0xf] %vm525, %v499
  %533 = vst.msk [vmem:[%s8 + $0x1c] sm:$0xf] %vm525, %v500
  %534 = vst.msk [vmem:[%s8 + $0x20] sm:$0xf] %vm525, %v501
  %535 = vst.msk [vmem:[%s8 + $0x24] sm:$0xf] %vm525, %v502
  %536 = vst.msk [vmem:[%s8 + $0x28] sm:$0xf] %vm525, %v503
  %537 = vst.msk [vmem:[%s8 + $0x2c] sm:$0xf] %vm525, %v504
  %538 = vst.msk [vmem:[%s8 + $0x30] sm:$0xf] %vm525, %v505
  %539 = vst.msk [vmem:[%s8 + $0x34] sm:$0xf] %vm525, %v506
  %540 = vst.msk [vmem:[%s8 + $0x38] sm:$0xf] %vm525, %v507
  %541 = vst.msk [vmem:[%s8 + $0x3c] sm:$0xf] %vm525, %v508
  %v542 = vld [vmem:[%s2] sm:$0xf]
  %v543 = vld [vmem:[%s2 + $0x4] sm:$0xf]
  %v544 = vld [vmem:[%s2 + $0x8] sm:$0xf]
  %v545 = vld [vmem:[%s2 + $0xc] sm:$0xf]
  %v546 = vld [vmem:[%s4 + $0x1] sm:$0x1]
  %v547 = vlaneseq
  %v548 = vshrl.u32 %v547, 7
  %v549 = vsub.s32 0, %v548
  %v550 = vrot.slane %v546, %v549
  %v555 = vunpack.c.l.b16 %v542
  %v556 = vunpack.c.l.b16 %v543
  %v557 = vunpack.c.l.b16 %v544
  %v558 = vunpack.c.l.b16 %v545
  %v559 = vpack.c.b16 %v556, %v555
  %v560 = vpack.c.b16 %v558, %v557
  %563 = vmatprep.subr.bf16.mxu0 0
  %564 = vmatpush1.bf16.msra.mxu0 %v559
  %565 = vmatprep.subr.bf16.mxu0 0
  %566 = vmatpush1.bf16.msra.mxu0 %v560
  %567 = vmatprep.subr.bf16.mxu0 0
  %568 = vmatpush1.bf16.msra.mxu0 0
  %569 = vmatprep.subr.bf16.mxu0 0
  %570 = vmatpush1.bf16.msra.mxu0 0
  %571 = vmatprep.subr.bf16.mxu0 0
  %572 = vmatpush1.bf16.msra.mxu0 0
  %573 = vmatprep.subr.bf16.mxu0 0
  %574 = vmatpush1.bf16.msra.mxu0 0
  %575 = vmatprep.subr.bf16.mxu0 0
  %576 = vmatpush1.bf16.msra.mxu0 0
  %577 = vmatprep.subr.bf16.mxu0 0
  %578 = vmatpush1.bf16.msra.mxu0 0
  %579 = vmatprep.subr.bf16.mxu0 0
  %580 = vmatpush1.bf16.msra.mxu0 0
  %581 = vmatprep.subr.bf16.mxu0 0
  %582 = vmatpush1.bf16.msra.mxu0 0
  %583 = vmatprep.subr.bf16.mxu0 0
  %584 = vmatpush1.bf16.msra.mxu0 0
  %585 = vmatprep.subr.bf16.mxu0 0
  %586 = vmatpush1.bf16.msra.mxu0 0
  %587 = vmatprep.subr.bf16.mxu0 0
  %588 = vmatpush1.bf16.msra.mxu0 0
  %589 = vmatprep.subr.bf16.mxu0 0
  %590 = vmatpush1.bf16.msra.mxu0 0
  %591 = vmatprep.subr.bf16.mxu0 0
  %592 = vmatpush1.bf16.msra.mxu0 0
  %593 = vmatprep.subr.bf16.mxu0 0
  %594 = vmatpush1.bf16.msra.mxu0 0
  %595 = vmatprep.mubr.bf16.mxu0 0
  %596 = vmatmul.mubr.bf16.gmra.mrb[0].mxu0 %v72
  %v597 = vpop.f32.mrb[0].mxu0
  %v598 = vadd.f32 %v550, %v597
  %v599 = vpop.f32.mrb[0].mxu0
  %v600 = vpop.f32.mrb[0].mxu0
  %v601 = vadd.f32 %v550, %v600
  %v602 = vpop.f32.mrb[0].mxu0
  %603 = vmatprep.mubr.bf16.mxu0 0
  %604 = vmatmul.mubr.bf16.gmra.mrb[0].mxu0 %v75
  %v605 = vpop.f32.mrb[0].mxu0
  %v606 = vadd.f32 %v550, %v605
  %v607 = vpop.f32.mrb[0].mxu0
  %v608 = vpop.f32.mrb[0].mxu0
  %v609 = vadd.f32 %v550, %v608
  %v610 = vpop.f32.mrb[0].mxu0
  %611 = vmatprep.mubr.bf16.mxu0 0
  %612 = vmatmul.mubr.bf16.gmra.mrb[0].mxu0 %v78
  %v613 = vpop.f32.mrb[0].mxu0
  %v614 = vadd.f32 %v550, %v613
  %v615 = vpop.f32.mrb[0].mxu0
  %v616 = vpop.f32.mrb[0].mxu0
  %v617 = vadd.f32 %v550, %v616
  %v618 = vpop.f32.mrb[0].mxu0
  %619 = vmatprep.mubr.bf16.mxu0 0
  %620 = vmatmul.mubr.bf16.gmra.mrb[0].mxu0 %v81
  %v621 = vpop.f32.mrb[0].mxu0
  %v622 = vadd.f32 %v550, %v621
  %v623 = vpop.f32.mrb[0].mxu0
  %v624 = vpop.f32.mrb[0].mxu0
  %v625 = vadd.f32 %v550, %v624
  %v626 = vpop.f32.mrb[0].mxu0
  %627 = vmatprep.mubr.bf16.mxu0 0
  %628 = vmatmul.mubr.bf16.gmra.mrb[0].mxu0 %v84
  %v629 = vpop.f32.mrb[0].mxu0
  %v630 = vadd.f32 %v550, %v629
  %v631 = vpop.f32.mrb[0].mxu0
  %v632 = vpop.f32.mrb[0].mxu0
  %v633 = vadd.f32 %v550, %v632
  %v634 = vpop.f32.mrb[0].mxu0
  %635 = vmatprep.mubr.bf16.mxu0 0
  %636 = vmatmul.mubr.bf16.gmra.mrb[0].mxu0 %v87
  %v637 = vpop.f32.mrb[0].mxu0
  %v638 = vadd.f32 %v550, %v637
  %v639 = vpop.f32.mrb[0].mxu0
  %v640 = vpop.f32.mrb[0].mxu0
  %v641 = vadd.f32 %v550, %v640
  %v642 = vpop.f32.mrb[0].mxu0
  %643 = vmatprep.mubr.bf16.mxu0 0
  %644 = vmatmul.mubr.bf16.gmra.mrb[0].mxu0 %v90
  %v645 = vpop.f32.mrb[0].mxu0
  %v646 = vadd.f32 %v550, %v645
  %v647 = vpop.f32.mrb[0].mxu0
  %v648 = vpop.f32.mrb[0].mxu0
  %v649 = vadd.f32 %v550, %v648
  %v650 = vpop.f32.mrb[0].mxu0
  %651 = vmatprep.mubr.bf16.mxu0 0
  %652 = vmatmul.mubr.bf16.gmra.mrb[0].mxu0 %v93
  %v653 = vpop.f32.mrb[0].mxu0
  %v654 = vadd.f32 %v550, %v653
  %v655 = vpop.f32.mrb[0].mxu0
  %v656 = vpop.f32.mrb[0].mxu0
  %v657 = vadd.f32 %v550, %v656
  %v658 = vpop.f32.mrb[0].mxu0
  %659 = vdwg.mxu0
  %v660 = vpack.c.bf16 %v601, %v598
  %v661 = vpack.c.bf16 %v609, %v606
  %v662 = vpack.c.bf16 %v617, %v614
  %v663 = vpack.c.bf16 %v625, %v622
  %v664 = vpack.c.bf16 %v633, %v630
  %v665 = vpack.c.bf16 %v641, %v638
  %v666 = vpack.c.bf16 %v649, %v646
  %v667 = vpack.c.bf16 %v657, %v654
  %v676 = vunpack.c.l.b16 %v660
  %v677 = vunpack.c.h.b16 %v660
  %v678 = vunpack.c.l.b16 %v661
  %v679 = vunpack.c.h.b16 %v661
  %v680 = vunpack.c.l.b16 %v662
  %v681 = vunpack.c.h.b16 %v662
  %v682 = vunpack.c.l.b16 %v663
  %v683 = vunpack.c.h.b16 %v663
  %v684 = vunpack.c.l.b16 %v664
  %v685 = vunpack.c.h.b16 %v664
  %v686 = vunpack.c.l.b16 %v665
  %v687 = vunpack.c.h.b16 %v665
  %v688 = vunpack.c.l.b16 %v666
  %v689 = vunpack.c.h.b16 %v666
  %v690 = vunpack.c.l.b16 %v667
  %v691 = vunpack.c.h.b16 %v667
  %v692 = vpack.c.b16 %v676, %v676
  %v693 = vpack.c.b16 %v677, %v677
  %v694 = vpack.c.b16 %v678, %v678
  %v695 = vpack.c.b16 %v679, %v679
  %v696 = vpack.c.b16 %v680, %v680
  %v697 = vpack.c.b16 %v681, %v681
  %v698 = vpack.c.b16 %v682, %v682
  %v699 = vpack.c.b16 %v683, %v683
  %v700 = vpack.c.b16 %v684, %v684
  %v701 = vpack.c.b16 %v685, %v685
  %v702 = vpack.c.b16 %v686, %v686
  %v703 = vpack.c.b16 %v687, %v687
  %v704 = vpack.c.b16 %v688, %v688
  %v705 = vpack.c.b16 %v689, %v689
  %v706 = vpack.c.b16 %v690, %v690
  %v707 = vpack.c.b16 %v691, %v691
  %708 = vrot.lane.b32.xlu0 %v692, 32
  %v709 = vpop.permute.xlu0 %708
  %710 = vrot.lane.b32.xlu0 %v693, 32
  %v711 = vpop.permute.xlu0 %710
  %712 = vrot.lane.b32.xlu0 %v694, 32
  %v713 = vpop.permute.xlu0 %712
  %714 = vrot.lane.b32.xlu0 %v695, 32
  %v715 = vpop.permute.xlu0 %714
  %716 = vrot.lane.b32.xlu0 %v696, 32
  %v717 = vpop.permute.xlu0 %716
  %718 = vrot.lane.b32.xlu0 %v697, 32
  %v719 = vpop.permute.xlu0 %718
  %720 = vrot.lane.b32.xlu0 %v698, 32
  %v721 = vpop.permute.xlu0 %720
  %722 = vrot.lane.b32.xlu0 %v699, 32
  %v723 = vpop.permute.xlu0 %722
  %724 = vrot.lane.b32.xlu0 %v700, 32
  %v725 = vpop.permute.xlu0 %724
  %726 = vrot.lane.b32.xlu0 %v701, 32
  %v727 = vpop.permute.xlu0 %726
  %728 = vrot.lane.b32.xlu0 %v702, 32
  %v729 = vpop.permute.xlu0 %728
  %730 = vrot.lane.b32.xlu0 %v703, 32
  %v731 = vpop.permute.xlu0 %730
  %732 = vrot.lane.b32.xlu0 %v704, 32
  %v733 = vpop.permute.xlu0 %732
  %734 = vrot.lane.b32.xlu0 %v705, 32
  %v735 = vpop.permute.xlu0 %734
  %736 = vrot.lane.b32.xlu0 %v706, 32
  %v737 = vpop.permute.xlu0 %736
  %738 = vrot.lane.b32.xlu0 %v707, 32
  %v739 = vpop.permute.xlu0 %738
  %vm756 = vcmask 519424
  %757 = vst.msk [vmem:[%s8] sm:$0xf] %vm756, %v709
  %758 = vst.msk [vmem:[%s8 + $0x4] sm:$0xf] %vm756, %v711
  %759 = vst.msk [vmem:[%s8 + $0x8] sm:$0xf] %vm756, %v713
  %760 = vst.msk [vmem:[%s8 + $0xc] sm:$0xf] %vm756, %v715
  %761 = vst.msk [vmem:[%s8 + $0x10] sm:$0xf] %vm756, %v717
  %762 = vst.msk [vmem:[%s8 + $0x14] sm:$0xf] %vm756, %v719
  %763 = vst.msk [vmem:[%s8 + $0x18] sm:$0xf] %vm756, %v721
  %764 = vst.msk [vmem:[%s8 + $0x1c] sm:$0xf] %vm756, %v723
  %765 = vst.msk [vmem:[%s8 + $0x20] sm:$0xf] %vm756, %v725
  %766 = vst.msk [vmem:[%s8 + $0x24] sm:$0xf] %vm756, %v727
  %767 = vst.msk [vmem:[%s8 + $0x28] sm:$0xf] %vm756, %v729
  %768 = vst.msk [vmem:[%s8 + $0x2c] sm:$0xf] %vm756, %v731
  %769 = vst.msk [vmem:[%s8 + $0x30] sm:$0xf] %vm756, %v733
  %770 = vst.msk [vmem:[%s8 + $0x34] sm:$0xf] %vm756, %v735
  %771 = vst.msk [vmem:[%s8 + $0x38] sm:$0xf] %vm756, %v737
  %772 = vst.msk [vmem:[%s8 + $0x3c] sm:$0xf] %vm756, %v739
  %v773 = vld [vmem:[%s7] sm:$0x3]
  %782 = vrot.lane.b32.xlu0 %v192, 124
  %v783 = vpop.permute.xlu0 %782
  %784 = vrot.lane.b32.xlu0 %v193, 124
  %v785 = vpop.permute.xlu0 %784
  %786 = vrot.lane.b32.xlu0 %v194, 124
  %v787 = vpop.permute.xlu0 %786
  %788 = vrot.lane.b32.xlu0 %v195, 124
  %v789 = vpop.permute.xlu0 %788
  %790 = vrot.lane.b32.xlu0 %v196, 124
  %v791 = vpop.permute.xlu0 %790
  %792 = vrot.lane.b32.xlu0 %v197, 124
  %v793 = vpop.permute.xlu0 %792
  %794 = vrot.lane.b32.xlu0 %v198, 124
  %v795 = vpop.permute.xlu0 %794
  %796 = vrot.lane.b32.xlu0 %v199, 124
  %v797 = vpop.permute.xlu0 %796
  %v799 = vsel %vm201, %v783, 0
  %v802 = vsel %vm201, %v785, 0
  %v805 = vsel %vm201, %v787, 0
  %v808 = vsel %vm201, %v789, 0
  %v811 = vsel %vm201, %v791, 0
  %v814 = vsel %vm201, %v793, 0
  %v817 = vsel %vm201, %v795, 0
  %v820 = vsel %vm201, %v797, 0
  %v823 = vsel %vm226, %v773, 0
  %825 = vmatprep.subr.bf16.mxu0 0
  %826 = vmatpush1.bf16.msra.mxu0 %v823
  %827 = vmatprep.subr.bf16.mxu0 0
  %828 = vmatpush1.bf16.msra.mxu0 0
  %829 = vmatprep.subr.bf16.mxu0 0
  %830 = vmatpush1.bf16.msra.mxu0 0
  %831 = vmatprep.subr.bf16.mxu0 0
  %832 = vmatpush1.bf16.msra.mxu0 0
  %833 = vmatprep.subr.bf16.mxu0 0
  %834 = vmatpush1.bf16.msra.mxu0 0
  %835 = vmatprep.subr.bf16.mxu0 0
  %836 = vmatpush1.bf16.msra.mxu0 0
  %837 = vmatprep.subr.bf16.mxu0 0
  %838 = vmatpush1.bf16.msra.mxu0 0
  %839 = vmatprep.subr.bf16.mxu0 0
  %840 = vmatpush1.bf16.msra.mxu0 0
  %841 = vmatprep.subr.bf16.mxu0 0
  %842 = vmatpush1.bf16.msra.mxu0 0
  %843 = vmatprep.subr.bf16.mxu0 0
  %844 = vmatpush1.bf16.msra.mxu0 0
  %845 = vmatprep.subr.bf16.mxu0 0
  %846 = vmatpush1.bf16.msra.mxu0 0
  %847 = vmatprep.subr.bf16.mxu0 0
  %848 = vmatpush1.bf16.msra.mxu0 0
  %849 = vmatprep.subr.bf16.mxu0 0
  %850 = vmatpush1.bf16.msra.mxu0 0
  %851 = vmatprep.subr.bf16.mxu0 0
  %852 = vmatpush1.bf16.msra.mxu0 0
  %853 = vmatprep.subr.bf16.mxu0 0
  %854 = vmatpush1.bf16.msra.mxu0 0
  %855 = vmatprep.subr.bf16.mxu0 0
  %856 = vmatpush1.bf16.msra.mxu0 0
  %857 = vmatprep.mubr.bf16.mxu0 0
  %858 = vmatmul.mubr.bf16.gmra.mrb[0].mxu0 %v799
  %v859 = vpop.f32.mrb[0].mxu0
  %v860 = vadd.f32 0.0, %v859
  %v861 = vpop.f32.mrb[0].mxu0
  %v862 = vpop.f32.mrb[0].mxu0
  %v863 = vadd.f32 0.0, %v862
  %v864 = vpop.f32.mrb[0].mxu0
  %865 = vmatprep.mubr.bf16.mxu0 0
  %866 = vmatmul.mubr.bf16.gmra.mrb[0].mxu0 %v802
  %v867 = vpop.f32.mrb[0].mxu0
  %v868 = vadd.f32 0.0, %v867
  %v869 = vpop.f32.mrb[0].mxu0
  %v870 = vpop.f32.mrb[0].mxu0
  %v871 = vadd.f32 0.0, %v870
  %v872 = vpop.f32.mrb[0].mxu0
  %873 = vmatprep.mubr.bf16.mxu0 0
  %874 = vmatmul.mubr.bf16.gmra.mrb[0].mxu0 %v805
  %v875 = vpop.f32.mrb[0].mxu0
  %v876 = vadd.f32 0.0, %v875
  %v877 = vpop.f32.mrb[0].mxu0
  %v878 = vpop.f32.mrb[0].mxu0
  %v879 = vadd.f32 0.0, %v878
  %v880 = vpop.f32.mrb[0].mxu0
  %881 = vmatprep.mubr.bf16.mxu0 0
  %882 = vmatmul.mubr.bf16.gmra.mrb[0].mxu0 %v808
  %v883 = vpop.f32.mrb[0].mxu0
  %v884 = vadd.f32 0.0, %v883
  %v885 = vpop.f32.mrb[0].mxu0
  %v886 = vpop.f32.mrb[0].mxu0
  %v887 = vadd.f32 0.0, %v886
  %v888 = vpop.f32.mrb[0].mxu0
  %889 = vmatprep.mubr.bf16.mxu0 0
  %890 = vmatmul.mubr.bf16.gmra.mrb[0].mxu0 %v811
  %v891 = vpop.f32.mrb[0].mxu0
  %v892 = vadd.f32 0.0, %v891
  %v893 = vpop.f32.mrb[0].mxu0
  %v894 = vpop.f32.mrb[0].mxu0
  %v895 = vadd.f32 0.0, %v894
  %v896 = vpop.f32.mrb[0].mxu0
  %897 = vmatprep.mubr.bf16.mxu0 0
  %898 = vmatmul.mubr.bf16.gmra.mrb[0].mxu0 %v814
  %v899 = vpop.f32.mrb[0].mxu0
  %v900 = vadd.f32 0.0, %v899
  %v901 = vpop.f32.mrb[0].mxu0
  %v902 = vpop.f32.mrb[0].mxu0
  %v903 = vadd.f32 0.0, %v902
  %v904 = vpop.f32.mrb[0].mxu0
  %905 = vmatprep.mubr.bf16.mxu0 0
  %906 = vmatmul.mubr.bf16.gmra.mrb[0].mxu0 %v817
  %v907 = vpop.f32.mrb[0].mxu0
  %v908 = vadd.f32 0.0, %v907
  %v909 = vpop.f32.mrb[0].mxu0
  %v910 = vpop.f32.mrb[0].mxu0
  %v911 = vadd.f32 0.0, %v910
  %v912 = vpop.f32.mrb[0].mxu0
  %913 = vmatprep.mubr.bf16.mxu0 0
  %914 = vmatmul.mubr.bf16.gmra.mrb[0].mxu0 %v820
  %v915 = vpop.f32.mrb[0].mxu0
  %v916 = vadd.f32 0.0, %v915
  %v917 = vpop.f32.mrb[0].mxu0
  %v918 = vpop.f32.mrb[0].mxu0
  %v919 = vadd.f32 0.0, %v918
  %v920 = vpop.f32.mrb[0].mxu0
  %921 = vdwg.mxu0
  %v922 = vld [vmem:[%s3] sm:$0xf]
  %v923 = vld [vmem:[%s3 + $0x4] sm:$0xf]
  %v924 = vld [vmem:[%s3 + $0x8] sm:$0xf]
  %v925 = vld [vmem:[%s3 + $0xc] sm:$0xf]
  %v926 = vld [vmem:[%s4 + $0x2] sm:$0x1]
  %v927 = vlaneseq
  %v928 = vshrl.u32 %v927, 7
  %v929 = vsub.s32 0, %v928
  %v930 = vrot.slane %v926, %v929
  %v935 = vunpack.c.l.b16 %v922
  %v936 = vunpack.c.l.b16 %v923
  %v937 = vunpack.c.l.b16 %v924
  %v938 = vunpack.c.l.b16 %v925
  %v939 = vpack.c.b16 %v936, %v935
  %v940 = vpack.c.b16 %v938, %v937
  %943 = vmatprep.subr.bf16.mxu0 0
  %944 = vmatpush1.bf16.msra.mxu0 %v939
  %945 = vmatprep.subr.bf16.mxu0 0
  %946 = vmatpush1.bf16.msra.mxu0 %v940
  %947 = vmatprep.subr.bf16.mxu0 0
  %948 = vmatpush1.bf16.msra.mxu0 0
  %949 = vmatprep.subr.bf16.mxu0 0
  %950 = vmatpush1.bf16.msra.mxu0 0
  %951 = vmatprep.subr.bf16.mxu0 0
  %952 = vmatpush1.bf16.msra.mxu0 0
  %953 = vmatprep.subr.bf16.mxu0 0
  %954 = vmatpush1.bf16.msra.mxu0 0
  %955 = vmatprep.subr.bf16.mxu0 0
  %956 = vmatpush1.bf16.msra.mxu0 0
  %957 = vmatprep.subr.bf16.mxu0 0
  %958 = vmatpush1.bf16.msra.mxu0 0
  %959 = vmatprep.subr.bf16.mxu0 0
  %960 = vmatpush1.bf16.msra.mxu0 0
  %961 = vmatprep.subr.bf16.mxu0 0
  %962 = vmatpush1.bf16.msra.mxu0 0
  %963 = vmatprep.subr.bf16.mxu0 0
  %964 = vmatpush1.bf16.msra.mxu0 0
  %965 = vmatprep.subr.bf16.mxu0 0
  %966 = vmatpush1.bf16.msra.mxu0 0
  %967 = vmatprep.subr.bf16.mxu0 0
  %968 = vmatpush1.bf16.msra.mxu0 0
  %969 = vmatprep.subr.bf16.mxu0 0
  %970 = vmatpush1.bf16.msra.mxu0 0
  %971 = vmatprep.subr.bf16.mxu0 0
  %972 = vmatpush1.bf16.msra.mxu0 0
  %973 = vmatprep.subr.bf16.mxu0 0
  %974 = vmatpush1.bf16.msra.mxu0 0
  %975 = vmatprep.mubr.bf16.mxu0 0
  %976 = vmatmul.mubr.bf16.gmra.mrb[0].mxu0 %v72
  %v977 = vpop.f32.mrb[0].mxu0
  %v978 = vadd.f32 %v930, %v977
  %v979 = vpop.f32.mrb[0].mxu0
  %v980 = vpop.f32.mrb[0].mxu0
  %v981 = vadd.f32 %v930, %v980
  %v982 = vpop.f32.mrb[0].mxu0
  %983 = vmatprep.mubr.bf16.mxu0 0
  %984 = vmatmul.mubr.bf16.gmra.mrb[0].mxu0 %v75
  %v985 = vpop.f32.mrb[0].mxu0
  %v986 = vadd.f32 %v930, %v985
  %v987 = vpop.f32.mrb[0].mxu0
  %v988 = vpop.f32.mrb[0].mxu0
  %v989 = vadd.f32 %v930, %v988
  %v990 = vpop.f32.mrb[0].mxu0
  %991 = vmatprep.mubr.bf16.mxu0 0
  %992 = vmatmul.mubr.bf16.gmra.mrb[0].mxu0 %v78
  %v993 = vpop.f32.mrb[0].mxu0
  %v994 = vadd.f32 %v930, %v993
  %v995 = vpop.f32.mrb[0].mxu0
  %v996 = vpop.f32.mrb[0].mxu0
  %v997 = vadd.f32 %v930, %v996
  %v998 = vpop.f32.mrb[0].mxu0
  %999 = vmatprep.mubr.bf16.mxu0 0
  %1000 = vmatmul.mubr.bf16.gmra.mrb[0].mxu0 %v81
  %v1001 = vpop.f32.mrb[0].mxu0
  %v1002 = vadd.f32 %v930, %v1001
  %v1003 = vpop.f32.mrb[0].mxu0
  %v1004 = vpop.f32.mrb[0].mxu0
  %v1005 = vadd.f32 %v930, %v1004
  %v1006 = vpop.f32.mrb[0].mxu0
  %1007 = vmatprep.mubr.bf16.mxu0 0
  %1008 = vmatmul.mubr.bf16.gmra.mrb[0].mxu0 %v84
  %v1009 = vpop.f32.mrb[0].mxu0
  %v1010 = vadd.f32 %v930, %v1009
  %v1011 = vpop.f32.mrb[0].mxu0
  %v1012 = vpop.f32.mrb[0].mxu0
  %v1013 = vadd.f32 %v930, %v1012
  %v1014 = vpop.f32.mrb[0].mxu0
  %1015 = vmatprep.mubr.bf16.mxu0 0
  %1016 = vmatmul.mubr.bf16.gmra.mrb[0].mxu0 %v87
  %v1017 = vpop.f32.mrb[0].mxu0
  %v1018 = vadd.f32 %v930, %v1017
  %v1019 = vpop.f32.mrb[0].mxu0
  %v1020 = vpop.f32.mrb[0].mxu0
  %v1021 = vadd.f32 %v930, %v1020
  %v1022 = vpop.f32.mrb[0].mxu0
  %1023 = vmatprep.mubr.bf16.mxu0 0
  %1024 = vmatmul.mubr.bf16.gmra.mrb[0].mxu0 %v90
  %v1025 = vpop.f32.mrb[0].mxu0
  %v1026 = vadd.f32 %v930, %v1025
  %v1027 = vpop.f32.mrb[0].mxu0
  %v1028 = vpop.f32.mrb[0].mxu0
  %v1029 = vadd.f32 %v930, %v1028
  %v1030 = vpop.f32.mrb[0].mxu0
  %1031 = vmatprep.mubr.bf16.mxu0 0
  %1032 = vmatmul.mubr.bf16.gmra.mrb[0].mxu0 %v93
  %v1033 = vpop.f32.mrb[0].mxu0
  %v1034 = vadd.f32 %v930, %v1033
  %v1035 = vpop.f32.mrb[0].mxu0
  %v1036 = vpop.f32.mrb[0].mxu0
  %v1037 = vadd.f32 %v930, %v1036
  %v1038 = vpop.f32.mrb[0].mxu0
  %1039 = vdwg.mxu0
  %v1040 = vadd.f32 %v978, %v860
  %v1041 = vadd.f32 %v981, %v863
  %v1042 = vadd.f32 %v986, %v868
  %v1043 = vadd.f32 %v989, %v871
  %v1044 = vadd.f32 %v994, %v876
  %v1045 = vadd.f32 %v997, %v879
  %v1046 = vadd.f32 %v1002, %v884
  %v1047 = vadd.f32 %v1005, %v887
  %v1048 = vadd.f32 %v1010, %v892
  %v1049 = vadd.f32 %v1013, %v895
  %v1050 = vadd.f32 %v1018, %v900
  %v1051 = vadd.f32 %v1021, %v903
  %v1052 = vadd.f32 %v1026, %v908
  %v1053 = vadd.f32 %v1029, %v911
  %v1054 = vadd.f32 %v1034, %v916
  %v1055 = vadd.f32 %v1037, %v919
  %v1056 = vpack.c.bf16 %v1041, %v1040
  %v1057 = vpack.c.bf16 %v1043, %v1042
  %v1058 = vpack.c.bf16 %v1045, %v1044
  %v1059 = vpack.c.bf16 %v1047, %v1046
  %v1060 = vpack.c.bf16 %v1049, %v1048
  %v1061 = vpack.c.bf16 %v1051, %v1050
  %v1062 = vpack.c.bf16 %v1053, %v1052
  %v1063 = vpack.c.bf16 %v1055, %v1054
  %v1072 = vunpack.c.l.b16 %v1056
  %v1073 = vunpack.c.h.b16 %v1056
  %v1074 = vunpack.c.l.b16 %v1057
  %v1075 = vunpack.c.h.b16 %v1057
  %v1076 = vunpack.c.l.b16 %v1058
  %v1077 = vunpack.c.h.b16 %v1058
  %v1078 = vunpack.c.l.b16 %v1059
  %v1079 = vunpack.c.h.b16 %v1059
  %v1080 = vunpack.c.l.b16 %v1060
  %v1081 = vunpack.c.h.b16 %v1060
  %v1082 = vunpack.c.l.b16 %v1061
  %v1083 = vunpack.c.h.b16 %v1061
  %v1084 = vunpack.c.l.b16 %v1062
  %v1085 = vunpack.c.h.b16 %v1062
  %v1086 = vunpack.c.l.b16 %v1063
  %v1087 = vunpack.c.h.b16 %v1063
  %v1088 = vpack.c.b16 %v1072, %v1072
  %v1089 = vpack.c.b16 %v1073, %v1073
  %v1090 = vpack.c.b16 %v1074, %v1074
  %v1091 = vpack.c.b16 %v1075, %v1075
  %v1092 = vpack.c.b16 %v1076, %v1076
  %v1093 = vpack.c.b16 %v1077, %v1077
  %v1094 = vpack.c.b16 %v1078, %v1078
  %v1095 = vpack.c.b16 %v1079, %v1079
  %v1096 = vpack.c.b16 %v1080, %v1080
  %v1097 = vpack.c.b16 %v1081, %v1081
  %v1098 = vpack.c.b16 %v1082, %v1082
  %v1099 = vpack.c.b16 %v1083, %v1083
  %v1100 = vpack.c.b16 %v1084, %v1084
  %v1101 = vpack.c.b16 %v1085, %v1085
  %v1102 = vpack.c.b16 %v1086, %v1086
  %v1103 = vpack.c.b16 %v1087, %v1087
  %1104 = vrot.lane.b32.xlu0 %v1088, 64
  %v1105 = vpop.permute.xlu0 %1104
  %1106 = vrot.lane.b32.xlu0 %v1089, 64
  %v1107 = vpop.permute.xlu0 %1106
  %1108 = vrot.lane.b32.xlu0 %v1090, 64
  %v1109 = vpop.permute.xlu0 %1108
  %1110 = vrot.lane.b32.xlu0 %v1091, 64
  %v1111 = vpop.permute.xlu0 %1110
  %1112 = vrot.lane.b32.xlu0 %v1092, 64
  %v1113 = vpop.permute.xlu0 %1112
  %1114 = vrot.lane.b32.xlu0 %v1093, 64
  %v1115 = vpop.permute.xlu0 %1114
  %1116 = vrot.lane.b32.xlu0 %v1094, 64
  %v1117 = vpop.permute.xlu0 %1116
  %1118 = vrot.lane.b32.xlu0 %v1095, 64
  %v1119 = vpop.permute.xlu0 %1118
  %1120 = vrot.lane.b32.xlu0 %v1096, 64
  %v1121 = vpop.permute.xlu0 %1120
  %1122 = vrot.lane.b32.xlu0 %v1097, 64
  %v1123 = vpop.permute.xlu0 %1122
  %1124 = vrot.lane.b32.xlu0 %v1098, 64
  %v1125 = vpop.permute.xlu0 %1124
  %1126 = vrot.lane.b32.xlu0 %v1099, 64
  %v1127 = vpop.permute.xlu0 %1126
  %1128 = vrot.lane.b32.xlu0 %v1100, 64
  %v1129 = vpop.permute.xlu0 %1128
  %1130 = vrot.lane.b32.xlu0 %v1101, 64
  %v1131 = vpop.permute.xlu0 %1130
  %1132 = vrot.lane.b32.xlu0 %v1102, 64
  %v1133 = vpop.permute.xlu0 %1132
  %1134 = vrot.lane.b32.xlu0 %v1103, 64
  %v1135 = vpop.permute.xlu0 %1134
  %vm1152 = vcmask 781824
  %1153 = vst.msk [vmem:[%s8] sm:$0xf] %vm1152, %v1105
  %1154 = vst.msk [vmem:[%s8 + $0x4] sm:$0xf] %vm1152, %v1107
  %1155 = vst.msk [vmem:[%s8 + $0x8] sm:$0xf] %vm1152, %v1109
  %1156 = vst.msk [vmem:[%s8 + $0xc] sm:$0xf] %vm1152, %v1111
  %1157 = vst.msk [vmem:[%s8 + $0x10] sm:$0xf] %vm1152, %v1113
  %1158 = vst.msk [vmem:[%s8 + $0x14] sm:$0xf] %vm1152, %v1115
  %1159 = vst.msk [vmem:[%s8 + $0x18] sm:$0xf] %vm1152, %v1117
  %1160 = vst.msk [vmem:[%s8 + $0x1c] sm:$0xf] %vm1152, %v1119
  %1161 = vst.msk [vmem:[%s8 + $0x20] sm:$0xf] %vm1152, %v1121
  %1162 = vst.msk [vmem:[%s8 + $0x24] sm:$0xf] %vm1152, %v1123
  %1163 = vst.msk [vmem:[%s8 + $0x28] sm:$0xf] %vm1152, %v1125
  %1164 = vst.msk [vmem:[%s8 + $0x2c] sm:$0xf] %vm1152, %v1127
  %1165 = vst.msk [vmem:[%s8 + $0x30] sm:$0xf] %vm1152, %v1129
  %1166 = vst.msk [vmem:[%s8 + $0x34] sm:$0xf] %vm1152, %v1131
  %1167 = vst.msk [vmem:[%s8 + $0x38] sm:$0xf] %vm1152, %v1133
  %1168 = vst.msk [vmem:[%s8 + $0x3c] sm:$0xf] %vm1152, %v1135
  // Predicated region
  $region34: #{tpu_custom_call.1} parent=0 // pred_check
    _
  $region35: #{tpu_custom_call.1} parent=0 // pred_check_branch
    %1170 = sbr.rel (0) target = $region37
  $region36: #{tpu_custom_call.1} parent=0 // pred_region
    _
  $region37: #{tpu_custom_call.1} parent=0 // pred_fallthru
    _
  // Predicated region
  $region38: #{tpu_custom_call.1} parent=0 // pred_check
    _
  $region39: #{tpu_custom_call.1} parent=0 // pred_check_branch
    %1172 = sbr.rel (0) target = $region41
  $region40: #{tpu_custom_call.1} parent=0 // pred_region
    _
  $region41: #{tpu_custom_call.1} parent=0 // pred_fallthru
    _

// kernel: tpu_custom_call.1
$region0: #{tpu_custom_call.1}
  #allocation0 [shape = 'u32[]', space=smem, size = 0x4, offset = 0x4, fixed_abs, tag = 'smem constant byte address 0x4 - core index']
  #allocation1 [shape = 'u32[144,128]{1,0:T(1,128)}', space=vmem, size = 0x12000, scoped, tag = 'internal scratch']
  %s0 = inlined_call_operand.vmem [shape: f32[128,32], index: 0, kind: input, shape index: {}]
  %s1 = inlined_call_operand.vmem [shape: bf16[32,32], index: 1, kind: input, shape index: {}]
  %s2 = inlined_call_operand.vmem [shape: bf16[32,32], index: 2, kind: input, shape index: {}]
  %s3 = inlined_call_operand.vmem [shape: bf16[32,32], index: 3, kind: input, shape index: {}]
  %s4 = inlined_call_operand.vmem [shape: f32[3,32], index: 4, kind: input, shape index: {}]
  %s5 = inlined_call_operand.vmem [shape: bf16[32,8], index: 5, kind: input, shape index: {}]
  %s6 = inlined_call_operand.vmem [shape: bf16[4,32], index: 6, kind: input, shape index: {}]
  %s7 = inlined_call_operand.vmem [shape: bf16[4,32], index: 7, kind: input, shape index: {}]
  %s8 = inlined_call_operand.vmem [shape: bf16[128,96], index: 8, kind: output, shape index: {}]
  %s9 = sld [smem:[#allocation0]]
  $region42: #{tpu_custom_call.1} parent=0
    _
  %s11 = ssub.s32 1, %s9
  %s12 = scalar_select 0, %s11, %s9
  // Predicated region
  $region2: #{tpu_custom_call.1} parent=0 // pred_check
    _
  $region3: #{tpu_custom_call.1} parent=0 // pred_check_branch
    %14 = sbr.rel (0) target = $region5
  $region4: #{tpu_custom_call.1} parent=0 // pred_region
    _
  $region5: #{tpu_custom_call.1} parent=0 // pred_fallthru
    _
  // Predicated region
  $region6: #{tpu_custom_call.1} parent=0 // pred_check
    _
  $region7: #{tpu_custom_call.1} parent=0 // pred_check_branch
    %16 = sbr.rel (0) target = $region9
  $region8: #{tpu_custom_call.1} parent=0 // pred_region
    _
  $region9: #{tpu_custom_call.1} parent=0 // pred_fallthru
    _
  // Predicated region
  $region10: #{tpu_custom_call.1} parent=0 // pred_check
    _
  $region11: #{tpu_custom_call.1} parent=0 // pred_check_branch
    %18 = sbr.rel (0) target = $region13
  $region12: #{tpu_custom_call.1} parent=0 // pred_region
    _
  $region13: #{tpu_custom_call.1} parent=0 // pred_fallthru
    _
  // Predicated region
  $region14: #{tpu_custom_call.1} parent=0 // pred_check
    _
  $region15: #{tpu_custom_call.1} parent=0 // pred_check_branch
    %20 = sbr.rel (0) target = $region17
  $region16: #{tpu_custom_call.1} parent=0 // pred_region
    _
  $region17: #{tpu_custom_call.1} parent=0 // pred_fallthru
    _
  // Predicated region
  $region18: #{tpu_custom_call.1} parent=0 // pred_check
    _
  $region19: #{tpu_custom_call.1} parent=0 // pred_check_branch
    %22 = sbr.rel (0) target = $region21
  $region20: #{tpu_custom_call.1} parent=0 // pred_region
    _
  $region21: #{tpu_custom_call.1} parent=0 // pred_fallthru
    _
  // Predicated region
  $region22: #{tpu_custom_call.1} parent=0 // pred_check
    _
  $region23: #{tpu_custom_call.1} parent=0 // pred_check_branch
    %24 = sbr.rel (0) target = $region25
  $region24: #{tpu_custom_call.1} parent=0 // pred_region
    _
  $region25: #{tpu_custom_call.1} parent=0 // pred_fallthru
    _
  // Predicated region
  $region26: #{tpu_custom_call.1} parent=0 // pred_check
    _
  $region27: #{tpu_custom_call.1} parent=0 // pred_check_branch
    %26 = sbr.rel (0) target = $region29
  $region28: #{tpu_custom_call.1} parent=0 // pred_region
    _
  $region29: #{tpu_custom_call.1} parent=0 // pred_fallthru
    _
  // Predicated region
  $region30: #{tpu_custom_call.1} parent=0 // pred_check
    _
  $region31: #{tpu_custom_call.1} parent=0 // pred_check_branch
    %28 = sbr.rel (0) target = $region33
  $region32: #{tpu_custom_call.1} parent=0 // pred_region
    _
  $region33: #{tpu_custom_call.1} parent=0 // pred_fallthru
    _
  %v30 = vld [vmem:[%s0] sm:$0xff]
  %v31 = vld [vmem:[%s0 + $0x8] sm:$0xff]
  %v32 = vld [vmem:[%s0 + $0x10] sm:$0xff]
  %v33 = vld [vmem:[%s0 + $0x18] sm:$0xff]
  %v34 = vld [vmem:[%s0 + $0x20] sm:$0xff]
  %v35 = vld [vmem:[%s0 + $0x28] sm:$0xff]
  %v36 = vld [vmem:[%s0 + $0x30] sm:$0xff]
  %v37 = vld [vmem:[%s0 + $0x38] sm:$0xff]
  %v38 = vld [vmem:[%s0 + $0x40] sm:$0xff]
  %v39 = vld [vmem:[%s0 + $0x48] sm:$0xff]
  %v40 = vld [vmem:[%s0 + $0x50] sm:$0xff]
  %v41 = vld [vmem:[%s0 + $0x58] sm:$0xff]
  %v42 = vld [vmem:[%s0 + $0x60] sm:$0xff]
  %v43 = vld [vmem:[%s0 + $0x68] sm:$0xff]
  %v44 = vld [vmem:[%s0 + $0x70] sm:$0xff]
  %v45 = vld [vmem:[%s0 + $0x78] sm:$0xff]
  %v46 = vpack.c.bf16 %v31, %v30
  %v47 = vpack.c.bf16 %v33, %v32
  %v48 = vpack.c.bf16 %v35, %v34
  %v49 = vpack.c.bf16 %v37, %v36
  %v50 = vpack.c.bf16 %v39, %v38
  %v51 = vpack.c.bf16 %v41, %v40
  %v52 = vpack.c.bf16 %v43, %v42
  %v53 = vpack.c.bf16 %v45, %v44
  %v54 = vld [vmem:[%s5] sm:$0xf]
  %v55 = vld [vmem:[%s5 + $0x4] sm:$0xf]
  %v56 = vld [vmem:[%s5 + $0x8] sm:$0xf]
  %v57 = vld [vmem:[%s5 + $0xc] sm:$0xf]
  %v62 = vunpack.c.l.b16 %v54
  %v63 = vunpack.c.l.b16 %v55
  %v64 = vunpack.c.l.b16 %v56
  %v65 = vunpack.c.l.b16 %v57
  %v66 = vpack.c.b16 %v63, %v62
  %v67 = vpack.c.b16 %v65, %v64
  %vm70 = vcmask 261120
  %v72 = vsel %vm70, %v46, 0
  %v75 = vsel %vm70, %v47, 0
  %v78 = vsel %vm70, %v48, 0
  %v81 = vsel %vm70, %v49, 0
  %v84 = vsel %vm70, %v50, 0
  %v87 = vsel %vm70, %v51, 0
  %v90 = vsel %vm70, %v52, 0
  %v93 = vsel %vm70, %v53, 0
  %95 = vmatprep.subr.bf16.mxu0 0
  %96 = vmatpush1.bf16.msra.mxu0 %v66
  %97 = vmatprep.subr.bf16.mxu0 0
  %98 = vmatpush1.bf16.msra.mxu0 %v67
  %99 = vmatprep.subr.bf16.mxu0 0
  %100 = vmatpush1.bf16.msra.mxu0 0
  %101 = vmatprep.subr.bf16.mxu0 0
  %102 = vmatpush1.bf16.msra.mxu0 0
  %103 = vmatprep.subr.bf16.mxu0 0
  %104 = vmatpush1.bf16.msra.mxu0 0
  %105 = vmatprep.subr.bf16.mxu0 0
  %106 = vmatpush1.bf16.msra.mxu0 0
  %107 = vmatprep.subr.bf16.mxu0 0
  %108 = vmatpush1.bf16.msra.mxu0 0
  %109 = vmatprep.subr.bf16.mxu0 0
  %110 = vmatpush1.bf16.msra.mxu0 0
  %111 = vmatprep.subr.bf16.mxu0 0
  %112 = vmatpush1.bf16.msra.mxu0 0
  %113 = vmatprep.subr.bf16.mxu0 0
  %114 = vmatpush1.bf16.msra.mxu0 0
  %115 = vmatprep.subr.bf16.mxu0 0
  %116 = vmatpush1.bf16.msra.mxu0 0
  %117 = vmatprep.subr.bf16.mxu0 0
  %118 = vmatpush1.bf16.msra.mxu0 0
  %119 = vmatprep.subr.bf16.mxu0 0
  %120 = vmatpush1.bf16.msra.mxu0 0
  %121 = vmatprep.subr.bf16.mxu0 0
  %122 = vmatpush1.bf16.msra.mxu0 0
  %123 = vmatprep.subr.bf16.mxu0 0
  %124 = vmatpush1.bf16.msra.mxu0 0
  %125 = vmatprep.subr.bf16.mxu0 0
  %126 = vmatpush1.bf16.msra.mxu0 0
  %127 = vmatprep.mubr.bf16.mxu0 0
  %128 = vmatmul.mubr.bf16.gmra.mrb[0].mxu0 %v72
  %v129 = vpop.f32.mrb[0].mxu0
  %v130 = vadd.f32 0.0, %v129
  %v131 = vpop.f32.mrb[0].mxu0
  %v132 = vpop.f32.mrb[0].mxu0
  %v133 = vadd.f32 0.0, %v132
  %v134 = vpop.f32.mrb[0].mxu0
  %135 = vmatprep.mubr.bf16.mxu0 0
  %136 = vmatmul.mubr.bf16.gmra.mrb[0].mxu0 %v75
  %v137 = vpop.f32.mrb[0].mxu0
  %v138 = vadd.f32 0.0, %v137
  %v139 = vpop.f32.mrb[0].mxu0
  %v140 = vpop.f32.mrb[0].mxu0
  %v141 = vadd.f32 0.0, %v140
  %v142 = vpop.f32.mrb[0].mxu0
  %143 = vmatprep.mubr.bf16.mxu0 0
  %144 = vmatmul.mubr.bf16.gmra.mrb[0].mxu0 %v78
  %v145 = vpop.f32.mrb[0].mxu0
  %v146 = vadd.f32 0.0, %v145
  %v147 = vpop.f32.mrb[0].mxu0
  %v148 = vpop.f32.mrb[0].mxu0
  %v149 = vadd.f32 0.0, %v148
  %v150 = vpop.f32.mrb[0].mxu0
  %151 = vmatprep.mubr.bf16.mxu0 0
  %152 = vmatmul.mubr.bf16.gmra.mrb[0].mxu0 %v81
  %v153 = vpop.f32.mrb[0].mxu0
  %v154 = vadd.f32 0.0, %v153
  %v155 = vpop.f32.mrb[0].mxu0
  %v156 = vpop.f32.mrb[0].mxu0
  %v157 = vadd.f32 0.0, %v156
  %v158 = vpop.f32.mrb[0].mxu0
  %159 = vmatprep.mubr.bf16.mxu0 0
  %160 = vmatmul.mubr.bf16.gmra.mrb[0].mxu0 %v84
  %v161 = vpop.f32.mrb[0].mxu0
  %v162 = vadd.f32 0.0, %v161
  %v163 = vpop.f32.mrb[0].mxu0
  %v164 = vpop.f32.mrb[0].mxu0
  %v165 = vadd.f32 0.0, %v164
  %v166 = vpop.f32.mrb[0].mxu0
  %167 = vmatprep.mubr.bf16.mxu0 0
  %168 = vmatmul.mubr.bf16.gmra.mrb[0].mxu0 %v87
  %v169 = vpop.f32.mrb[0].mxu0
  %v170 = vadd.f32 0.0, %v169
  %v171 = vpop.f32.mrb[0].mxu0
  %v172 = vpop.f32.mrb[0].mxu0
  %v173 = vadd.f32 0.0, %v172
  %v174 = vpop.f32.mrb[0].mxu0
  %175 = vmatprep.mubr.bf16.mxu0 0
  %176 = vmatmul.mubr.bf16.gmra.mrb[0].mxu0 %v90
  %v177 = vpop.f32.mrb[0].mxu0
  %v178 = vadd.f32 0.0, %v177
  %v179 = vpop.f32.mrb[0].mxu0
  %v180 = vpop.f32.mrb[0].mxu0
  %v181 = vadd.f32 0.0, %v180
  %v182 = vpop.f32.mrb[0].mxu0
  %183 = vmatprep.mubr.bf16.mxu0 0
  %184 = vmatmul.mubr.bf16.gmra.mrb[0].mxu0 %v93
  %v185 = vpop.f32.mrb[0].mxu0
  %v186 = vadd.f32 0.0, %v185
  %v187 = vpop.f32.mrb[0].mxu0
  %v188 = vpop.f32.mrb[0].mxu0
  %v189 = vadd.f32 0.0, %v188
  %v190 = vpop.f32.mrb[0].mxu0
  %191 = vdwg.mxu0
  %v192 = vpack.c.bf16 %v133, %v130
  %v193 = vpack.c.bf16 %v141, %v138
  %v194 = vpack.c.bf16 %v149, %v146
  %v195 = vpack.c.bf16 %v157, %v154
  %v196 = vpack.c.bf16 %v165, %v162
  %v197 = vpack.c.bf16 %v173, %v170
  %v198 = vpack.c.bf16 %v181, %v178
  %v199 = vpack.c.bf16 %v189, %v186
  %v200 = vld [vmem:[%s6] sm:$0x3]
  %vm201 = vcmask 31744
  %v203 = vsel %vm201, %v192, 0
  %v206 = vsel %vm201, %v193, 0
  %v209 = vsel %vm201, %v194, 0
  %v212 = vsel %vm201, %v195, 0
  %v215 = vsel %vm201, %v196, 0
  %v218 = vsel %vm201, %v197, 0
  %v221 = vsel %vm201, %v198, 0
  %v224 = vsel %vm201, %v199, 0
  %vm226 = vcmask 1041408
  %v228 = vsel %vm226, %v200, 0
  %230 = vmatprep.subr.bf16.mxu0 0
  %231 = vmatpush1.bf16.msra.mxu0 %v228
  %232 = vmatprep.subr.bf16.mxu0 0
  %233 = vmatpush1.bf16.msra.mxu0 0
  %234 = vmatprep.subr.bf16.mxu0 0
  %235 = vmatpush1.bf16.msra.mxu0 0
  %236 = vmatprep.subr.bf16.mxu0 0
  %237 = vmatpush1.bf16.msra.mxu0 0
  %238 = vmatprep.subr.bf16.mxu0 0
  %239 = vmatpush1.bf16.msra.mxu0 0
  %240 = vmatprep.subr.bf16.mxu0 0
  %241 = vmatpush1.bf16.msra.mxu0 0
  %242 = vmatprep.subr.bf16.mxu0 0
  %243 = vmatpush1.bf16.msra.mxu0 0
  %244 = vmatprep.subr.bf16.mxu0 0
  %245 = vmatpush1.bf16.msra.mxu0 0
  %246 = vmatprep.subr.bf16.mxu0 0
  %247 = vmatpush1.bf16.msra.mxu0 0
  %248 = vmatprep.subr.bf16.mxu0 0
  %249 = vmatpush1.bf16.msra.mxu0 0
  %250 = vmatprep.subr.bf16.mxu0 0
  %251 = vmatpush1.bf16.msra.mxu0 0
  %252 = vmatprep.subr.bf16.mxu0 0
  %253 = vmatpush1.bf16.msra.mxu0 0
  %254 = vmatprep.subr.bf16.mxu0 0
  %255 = vmatpush1.bf16.msra.mxu0 0
  %256 = vmatprep.subr.bf16.mxu0 0
  %257 = vmatpush1.bf16.msra.mxu0 0
  %258 = vmatprep.subr.bf16.mxu0 0
  %259 = vmatpush1.bf16.msra.mxu0 0
  %260 = vmatprep.subr.bf16.mxu0 0
  %261 = vmatpush1.bf16.msra.mxu0 0
  %262 = vmatprep.mubr.bf16.mxu0 0
  %263 = vmatmul.mubr.bf16.gmra.mrb[0].mxu0 %v203
  %v264 = vpop.f32.mrb[0].mxu0
  %v265 = vadd.f32 0.0, %v264
  %v266 = vpop.f32.mrb[0].mxu0
  %v267 = vpop.f32.mrb[0].mxu0
  %v268 = vadd.f32 0.0, %v267
  %v269 = vpop.f32.mrb[0].mxu0
  %270 = vmatprep.mubr.bf16.mxu0 0
  %271 = vmatmul.mubr.bf16.gmra.mrb[0].mxu0 %v206
  %v272 = vpop.f32.mrb[0].mxu0
  %v273 = vadd.f32 0.0, %v272
  %v274 = vpop.f32.mrb[0].mxu0
  %v275 = vpop.f32.mrb[0].mxu0
  %v276 = vadd.f32 0.0, %v275
  %v277 = vpop.f32.mrb[0].mxu0
  %278 = vmatprep.mubr.bf16.mxu0 0
  %279 = vmatmul.mubr.bf16.gmra.mrb[0].mxu0 %v209
  %v280 = vpop.f32.mrb[0].mxu0
  %v281 = vadd.f32 0.0, %v280
  %v282 = vpop.f32.mrb[0].mxu0
  %v283 = vpop.f32.mrb[0].mxu0
  %v284 = vadd.f32 0.0, %v283
  %v285 = vpop.f32.mrb[0].mxu0
  %286 = vmatprep.mubr.bf16.mxu0 0
  %287 = vmatmul.mubr.bf16.gmra.mrb[0].mxu0 %v212
  %v288 = vpop.f32.mrb[0].mxu0
  %v289 = vadd.f32 0.0, %v288
  %v290 = vpop.f32.mrb[0].mxu0
  %v291 = vpop.f32.mrb[0].mxu0
  %v292 = vadd.f32 0.0, %v291
  %v293 = vpop.f32.mrb[0].mxu0
  %294 = vmatprep.mubr.bf16.mxu0 0
  %295 = vmatmul.mubr.bf16.gmra.mrb[0].mxu0 %v215
  %v296 = vpop.f32.mrb[0].mxu0
  %v297 = vadd.f32 0.0, %v296
  %v298 = vpop.f32.mrb[0].mxu0
  %v299 = vpop.f32.mrb[0].mxu0
  %v300 = vadd.f32 0.0, %v299
  %v301 = vpop.f32.mrb[0].mxu0
  %302 = vmatprep.mubr.bf16.mxu0 0
  %303 = vmatmul.mubr.bf16.gmra.mrb[0].mxu0 %v218
  %v304 = vpop.f32.mrb[0].mxu0
  %v305 = vadd.f32 0.0, %v304
  %v306 = vpop.f32.mrb[0].mxu0
  %v307 = vpop.f32.mrb[0].mxu0
  %v308 = vadd.f32 0.0, %v307
  %v309 = vpop.f32.mrb[0].mxu0
  %310 = vmatprep.mubr.bf16.mxu0 0
  %311 = vmatmul.mubr.bf16.gmra.mrb[0].mxu0 %v221
  %v312 = vpop.f32.mrb[0].mxu0
  %v313 = vadd.f32 0.0, %v312
  %v314 = vpop.f32.mrb[0].mxu0
  %v315 = vpop.f32.mrb[0].mxu0
  %v316 = vadd.f32 0.0, %v315
  %v317 = vpop.f32.mrb[0].mxu0
  %318 = vmatprep.mubr.bf16.mxu0 0
  %319 = vmatmul.mubr.bf16.gmra.mrb[0].mxu0 %v224
  %v320 = vpop.f32.mrb[0].mxu0
  %v321 = vadd.f32 0.0, %v320
  %v322 = vpop.f32.mrb[0].mxu0
  %v323 = vpop.f32.mrb[0].mxu0
  %v324 = vadd.f32 0.0, %v323
  %v325 = vpop.f32.mrb[0].mxu0
  %326 = vdwg.mxu0
  %v327 = vld [vmem:[%s1] sm:$0xf]
  %v328 = vld [vmem:[%s1 + $0x4] sm:$0xf]
  %v329 = vld [vmem:[%s1 + $0x8] sm:$0xf]
  %v330 = vld [vmem:[%s1 + $0xc] sm:$0xf]
  %v331 = vld [vmem:[%s4] sm:$0x1]
  %v332 = vlaneseq
  %v333 = vshrl.u32 %v332, 7
  %v334 = vsub.s32 0, %v333
  %v335 = vrot.slane %v331, %v334
  %v340 = vunpack.c.l.b16 %v327
  %v341 = vunpack.c.l.b16 %v328
  %v342 = vunpack.c.l.b16 %v329
  %v343 = vunpack.c.l.b16 %v330
  %v344 = vpack.c.b16 %v341, %v340
  %v345 = vpack.c.b16 %v343, %v342
  %348 = vmatprep.subr.bf16.mxu0 0
  %349 = vmatpush1.bf16.msra.mxu0 %v344
  %350 = vmatprep.subr.bf16.mxu0 0
  %351 = vmatpush1.bf16.msra.mxu0 %v345
  %352 = vmatprep.subr.bf16.mxu0 0
  %353 = vmatpush1.bf16.msra.mxu0 0
  %354 = vmatprep.subr.bf16.mxu0 0
  %355 = vmatpush1.bf16.msra.mxu0 0
  %356 = vmatprep.subr.bf16.mxu0 0
  %357 = vmatpush1.bf16.msra.mxu0 0
  %358 = vmatprep.subr.bf16.mxu0 0
  %359 = vmatpush1.bf16.msra.mxu0 0
  %360 = vmatprep.subr.bf16.mxu0 0
  %361 = vmatpush1.bf16.msra.mxu0 0
  %362 = vmatprep.subr.bf16.mxu0 0
  %363 = vmatpush1.bf16.msra.mxu0 0
  %364 = vmatprep.subr.bf16.mxu0 0
  %365 = vmatpush1.bf16.msra.mxu0 0
  %366 = vmatprep.subr.bf16.mxu0 0
  %367 = vmatpush1.bf16.msra.mxu0 0
  %368 = vmatprep.subr.bf16.mxu0 0
  %369 = vmatpush1.bf16.msra.mxu0 0
  %370 = vmatprep.subr.bf16.mxu0 0
  %371 = vmatpush1.bf16.msra.mxu0 0
  %372 = vmatprep.subr.bf16.mxu0 0
  %373 = vmatpush1.bf16.msra.mxu0 0
  %374 = vmatprep.subr.bf16.mxu0 0
  %375 = vmatpush1.bf16.msra.mxu0 0
  %376 = vmatprep.subr.bf16.mxu0 0
  %377 = vmatpush1.bf16.msra.mxu0 0
  %378 = vmatprep.subr.bf16.mxu0 0
  %379 = vmatpush1.bf16.msra.mxu0 0
  %380 = vmatprep.mubr.bf16.mxu0 0
  %381 = vmatmul.mubr.bf16.gmra.mrb[0].mxu0 %v72
  %v382 = vpop.f32.mrb[0].mxu0
  %v383 = vadd.f32 %v335, %v382
  %v384 = vpop.f32.mrb[0].mxu0
  %v385 = vpop.f32.mrb[0].mxu0
  %v386 = vadd.f32 %v335, %v385
  %v387 = vpop.f32.mrb[0].mxu0
  %388 = vmatprep.mubr.bf16.mxu0 0
  %389 = vmatmul.mubr.bf16.gmra.mrb[0].mxu0 %v75
  %v390 = vpop.f32.mrb[0].mxu0
  %v391 = vadd.f32 %v335, %v390
  %v392 = vpop.f32.mrb[0].mxu0
  %v393 = vpop.f32.mrb[0].mxu0
  %v394 = vadd.f32 %v335, %v393
  %v395 = vpop.f32.mrb[0].mxu0
  %396 = vmatprep.mubr.bf16.mxu0 0
  %397 = vmatmul.mubr.bf16.gmra.mrb[0].mxu0 %v78
  %v398 = vpop.f32.mrb[0].mxu0
  %v399 = vadd.f32 %v335, %v398
  %v400 = vpop.f32.mrb[0].mxu0
  %v401 = vpop.f32.mrb[0].mxu0
  %v402 = vadd.f32 %v335, %v401
  %v403 = vpop.f32.mrb[0].mxu0
  %404 = vmatprep.mubr.bf16.mxu0 0
  %405 = vmatmul.mubr.bf16.gmra.mrb[0].mxu0 %v81
  %v406 = vpop.f32.mrb[0].mxu0
  %v407 = vadd.f32 %v335, %v406
  %v408 = vpop.f32.mrb[0].mxu0
  %v409 = vpop.f32.mrb[0].mxu0
  %v410 = vadd.f32 %v335, %v409
  %v411 = vpop.f32.mrb[0].mxu0
  %412 = vmatprep.mubr.bf16.mxu0 0
  %413 = vmatmul.mubr.bf16.gmra.mrb[0].mxu0 %v84
  %v414 = vpop.f32.mrb[0].mxu0
  %v415 = vadd.f32 %v335, %v414
  %v416 = vpop.f32.mrb[0].mxu0
  %v417 = vpop.f32.mrb[0].mxu0
  %v418 = vadd.f32 %v335, %v417
  %v419 = vpop.f32.mrb[0].mxu0
  %420 = vmatprep.mubr.bf16.mxu0 0
  %421 = vmatmul.mubr.bf16.gmra.mrb[0].mxu0 %v87
  %v422 = vpop.f32.mrb[0].mxu0
  %v423 = vadd.f32 %v335, %v422
  %v424 = vpop.f32.mrb[0].mxu0
  %v425 = vpop.f32.mrb[0].mxu0
  %v426 = vadd.f32 %v335, %v425
  %v427 = vpop.f32.mrb[0].mxu0
  %428 = vmatprep.mubr.bf16.mxu0 0
  %429 = vmatmul.mubr.bf16.gmra.mrb[0].mxu0 %v90
  %v430 = vpop.f32.mrb[0].mxu0
  %v431 = vadd.f32 %v335, %v430
  %v432 = vpop.f32.mrb[0].mxu0
  %v433 = vpop.f32.mrb[0].mxu0
  %v434 = vadd.f32 %v335, %v433
  %v435 = vpop.f32.mrb[0].mxu0
  %436 = vmatprep.mubr.bf16.mxu0 0
  %437 = vmatmul.mubr.bf16.gmra.mrb[0].mxu0 %v93
  %v438 = vpop.f32.mrb[0].mxu0
  %v439 = vadd.f32 %v335, %v438
  %v440 = vpop.f32.mrb[0].mxu0
  %v441 = vpop.f32.mrb[0].mxu0
  %v442 = vadd.f32 %v335, %v441
  %v443 = vpop.f32.mrb[0].mxu0
  %444 = vdwg.mxu0
  %v445 = vadd.f32 %v383, %v265
  %v446 = vadd.f32 %v386, %v268
  %v447 = vadd.f32 %v391, %v273
  %v448 = vadd.f32 %v394, %v276
  %v449 = vadd.f32 %v399, %v281
  %v450 = vadd.f32 %v402, %v284
  %v451 = vadd.f32 %v407, %v289
  %v452 = vadd.f32 %v410, %v292
  %v453 = vadd.f32 %v415, %v297
  %v454 = vadd.f32 %v418, %v300
  %v455 = vadd.f32 %v423, %v305
  %v456 = vadd.f32 %v426, %v308
  %v457 = vadd.f32 %v431, %v313
  %v458 = vadd.f32 %v434, %v316
  %v459 = vadd.f32 %v439, %v321
  %v460 = vadd.f32 %v442, %v324
  %v461 = vpack.c.bf16 %v446, %v445
  %v462 = vpack.c.bf16 %v448, %v447
  %v463 = vpack.c.bf16 %v450, %v449
  %v464 = vpack.c.bf16 %v452, %v451
  %v465 = vpack.c.bf16 %v454, %v453
  %v466 = vpack.c.bf16 %v456, %v455
  %v467 = vpack.c.bf16 %v458, %v457
  %v468 = vpack.c.bf16 %v460, %v459
  %v477 = vunpack.c.l.b16 %v461
  %v478 = vunpack.c.h.b16 %v461
  %v479 = vunpack.c.l.b16 %v462
  %v480 = vunpack.c.h.b16 %v462
  %v481 = vunpack.c.l.b16 %v463
  %v482 = vunpack.c.h.b16 %v463
  %v483 = vunpack.c.l.b16 %v464
  %v484 = vunpack.c.h.b16 %v464
  %v485 = vunpack.c.l.b16 %v465
  %v486 = vunpack.c.h.b16 %v465
  %v487 = vunpack.c.l.b16 %v466
  %v488 = vunpack.c.h.b16 %v466
  %v489 = vunpack.c.l.b16 %v467
  %v490 = vunpack.c.h.b16 %v467
  %v491 = vunpack.c.l.b16 %v468
  %v492 = vunpack.c.h.b16 %v468
  %v493 = vpack.c.b16 %v477, %v477
  %v494 = vpack.c.b16 %v478, %v478
  %v495 = vpack.c.b16 %v479, %v479
  %v496 = vpack.c.b16 %v480, %v480
  %v497 = vpack.c.b16 %v481, %v481
  %v498 = vpack.c.b16 %v482, %v482
  %v499 = vpack.c.b16 %v483, %v483
  %v500 = vpack.c.b16 %v484, %v484
  %v501 = vpack.c.b16 %v485, %v485
  %v502 = vpack.c.b16 %v486, %v486
  %v503 = vpack.c.b16 %v487, %v487
  %v504 = vpack.c.b16 %v488, %v488
  %v505 = vpack.c.b16 %v489, %v489
  %v506 = vpack.c.b16 %v490, %v490
  %v507 = vpack.c.b16 %v491, %v491
  %v508 = vpack.c.b16 %v492, %v492
  %vm525 = vcmask 257024
  %526 = vst.msk [vmem:[%s8] sm:$0xf] %vm525, %v493
  %527 = vst.msk [vmem:[%s8 + $0x4] sm:$0xf] %vm525, %v494
  %528 = vst.msk [vmem:[%s8 + $0x8] sm:$0xf] %vm525, %v495
  %529 = vst.msk [vmem:[%s8 + $0xc] sm:$0xf] %vm525, %v496
  %530 = vst.msk [vmem:[%s8 + $0x10] sm:$0xf] %vm525, %v497
  %531 = vst.msk [vmem:[%s8 + $0x14] sm:$0xf] %vm525, %v498
  %532 = vst.msk [vmem:[%s8 + $0x18] sm:$0xf] %vm525, %v499
  %533 = vst.msk [vmem:[%s8 + $0x1c] sm:$0xf] %vm525, %v500
  %534 = vst.msk [vmem:[%s8 + $0x20] sm:$0xf] %vm525, %v501
  %535 = vst.msk [vmem:[%s8 + $0x24] sm:$0xf] %vm525, %v502
  %536 = vst.msk [vmem:[%s8 + $0x28] sm:$0xf] %vm525, %v503
  %537 = vst.msk [vmem:[%s8 + $0x2c] sm:$0xf] %vm525, %v504
  %538 = vst.msk [vmem:[%s8 + $0x30] sm:$0xf] %vm525, %v505
  %539 = vst.msk [vmem:[%s8 + $0x34] sm:$0xf] %vm525, %v506
  %540 = vst.msk [vmem:[%s8 + $0x38] sm:$0xf] %vm525, %v507
  %541 = vst.msk [vmem:[%s8 + $0x3c] sm:$0xf] %vm525, %v508
  %v542 = vld [vmem:[%s2] sm:$0xf]
  %v543 = vld [vmem:[%s2 + $0x4] sm:$0xf]
  %v544 = vld [vmem:[%s2 + $0x8] sm:$0xf]
  %v545 = vld [vmem:[%s2 + $0xc] sm:$0xf]
  %v546 = vld [vmem:[%s4 + $0x1] sm:$0x1]
  %v547 = vlaneseq
  %v548 = vshrl.u32 %v547, 7
  %v549 = vsub.s32 0, %v548
  %v550 = vrot.slane %v546, %v549
  %v555 = vunpack.c.l.b16 %v542
  %v556 = vunpack.c.l.b16 %v543
  %v557 = vunpack.c.l.b16 %v544
  %v558 = vunpack.c.l.b16 %v545
  %v559 = vpack.c.b16 %v556, %v555
  %v560 = vpack.c.b16 %v558, %v557
  %563 = vmatprep.subr.bf16.mxu0 0
  %564 = vmatpush1.bf16.msra.mxu0 %v559
  %565 = vmatprep.subr.bf16.mxu0 0
  %566 = vmatpush1.bf16.msra.mxu0 %v560
  %567 = vmatprep.subr.bf16.mxu0 0
  %568 = vmatpush1.bf16.msra.mxu0 0
  %569 = vmatprep.subr.bf16.mxu0 0
  %570 = vmatpush1.bf16.msra.mxu0 0
  %571 = vmatprep.subr.bf16.mxu0 0
  %572 = vmatpush1.bf16.msra.mxu0 0
  %573 = vmatprep.subr.bf16.mxu0 0
  %574 = vmatpush1.bf16.msra.mxu0 0
  %575 = vmatprep.subr.bf16.mxu0 0
  %576 = vmatpush1.bf16.msra.mxu0 0
  %577 = vmatprep.subr.bf16.mxu0 0
  %578 = vmatpush1.bf16.msra.mxu0 0
  %579 = vmatprep.subr.bf16.mxu0 0
  %580 = vmatpush1.bf16.msra.mxu0 0
  %581 = vmatprep.subr.bf16.mxu0 0
  %582 = vmatpush1.bf16.msra.mxu0 0
  %583 = vmatprep.subr.bf16.mxu0 0
  %584 = vmatpush1.bf16.msra.mxu0 0
  %585 = vmatprep.subr.bf16.mxu0 0
  %586 = vmatpush1.bf16.msra.mxu0 0
  %587 = vmatprep.subr.bf16.mxu0 0
  %588 = vmatpush1.bf16.msra.mxu0 0
  %589 = vmatprep.subr.bf16.mxu0 0
  %590 = vmatpush1.bf16.msra.mxu0 0
  %591 = vmatprep.subr.bf16.mxu0 0
  %592 = vmatpush1.bf16.msra.mxu0 0
  %593 = vmatprep.subr.bf16.mxu0 0
  %594 = vmatpush1.bf16.msra.mxu0 0
  %595 = vmatprep.mubr.bf16.mxu0 0
  %596 = vmatmul.mubr.bf16.gmra.mrb[0].mxu0 %v72
  %v597 = vpop.f32.mrb[0].mxu0
  %v598 = vadd.f32 %v550, %v597
  %v599 = vpop.f32.mrb[0].mxu0
  %v600 = vpop.f32.mrb[0].mxu0
  %v601 = vadd.f32 %v550, %v600
  %v602 = vpop.f32.mrb[0].mxu0
  %603 = vmatprep.mubr.bf16.mxu0 0
  %604 = vmatmul.mubr.bf16.gmra.mrb[0].mxu0 %v75
  %v605 = vpop.f32.mrb[0].mxu0
  %v606 = vadd.f32 %v550, %v605
  %v607 = vpop.f32.mrb[0].mxu0
  %v608 = vpop.f32.mrb[0].mxu0
  %v609 = vadd.f32 %v550, %v608
  %v610 = vpop.f32.mrb[0].mxu0
  %611 = vmatprep.mubr.bf16.mxu0 0
  %612 = vmatmul.mubr.bf16.gmra.mrb[0].mxu0 %v78
  %v613 = vpop.f32.mrb[0].mxu0
  %v614 = vadd.f32 %v550, %v613
  %v615 = vpop.f32.mrb[0].mxu0
  %v616 = vpop.f32.mrb[0].mxu0
  %v617 = vadd.f32 %v550, %v616
  %v618 = vpop.f32.mrb[0].mxu0
  %619 = vmatprep.mubr.bf16.mxu0 0
  %620 = vmatmul.mubr.bf16.gmra.mrb[0].mxu0 %v81
  %v621 = vpop.f32.mrb[0].mxu0
  %v622 = vadd.f32 %v550, %v621
  %v623 = vpop.f32.mrb[0].mxu0
  %v624 = vpop.f32.mrb[0].mxu0
  %v625 = vadd.f32 %v550, %v624
  %v626 = vpop.f32.mrb[0].mxu0
  %627 = vmatprep.mubr.bf16.mxu0 0
  %628 = vmatmul.mubr.bf16.gmra.mrb[0].mxu0 %v84
  %v629 = vpop.f32.mrb[0].mxu0
  %v630 = vadd.f32 %v550, %v629
  %v631 = vpop.f32.mrb[0].mxu0
  %v632 = vpop.f32.mrb[0].mxu0
  %v633 = vadd.f32 %v550, %v632
  %v634 = vpop.f32.mrb[0].mxu0
  %635 = vmatprep.mubr.bf16.mxu0 0
  %636 = vmatmul.mubr.bf16.gmra.mrb[0].mxu0 %v87
  %v637 = vpop.f32.mrb[0].mxu0
  %v638 = vadd.f32 %v550, %v637
  %v639 = vpop.f32.mrb[0].mxu0
  %v640 = vpop.f32.mrb[0].mxu0
  %v641 = vadd.f32 %v550, %v640
  %v642 = vpop.f32.mrb[0].mxu0
  %643 = vmatprep.mubr.bf16.mxu0 0
  %644 = vmatmul.mubr.bf16.gmra.mrb[0].mxu0 %v90
  %v645 = vpop.f32.mrb[0].mxu0
  %v646 = vadd.f32 %v550, %v645
  %v647 = vpop.f32.mrb[0].mxu0
  %v648 = vpop.f32.mrb[0].mxu0
  %v649 = vadd.f32 %v550, %v648
  %v650 = vpop.f32.mrb[0].mxu0
  %651 = vmatprep.mubr.bf16.mxu0 0
  %652 = vmatmul.mubr.bf16.gmra.mrb[0].mxu0 %v93
  %v653 = vpop.f32.mrb[0].mxu0
  %v654 = vadd.f32 %v550, %v653
  %v655 = vpop.f32.mrb[0].mxu0
  %v656 = vpop.f32.mrb[0].mxu0
  %v657 = vadd.f32 %v550, %v656
  %v658 = vpop.f32.mrb[0].mxu0
  %659 = vdwg.mxu0
  %v660 = vpack.c.bf16 %v601, %v598
  %v661 = vpack.c.bf16 %v609, %v606
  %v662 = vpack.c.bf16 %v617, %v614
  %v663 = vpack.c.bf16 %v625, %v622
  %v664 = vpack.c.bf16 %v633, %v630
  %v665 = vpack.c.bf16 %v641, %v638
  %v666 = vpack.c.bf16 %v649, %v646
  %v667 = vpack.c.bf16 %v657, %v654
  %v676 = vunpack.c.l.b16 %v660
  %v677 = vunpack.c.h.b16 %v660
  %v678 = vunpack.c.l.b16 %v661
  %v679 = vunpack.c.h.b16 %v661
  %v680 = vunpack.c.l.b16 %v662
  %v681 = vunpack.c.h.b16 %v662
  %v682 = vunpack.c.l.b16 %v663
  %v683 = vunpack.c.h.b16 %v663
  %v684 = vunpack.c.l.b16 %v664
  %v685 = vunpack.c.h.b16 %v664
  %v686 = vunpack.c.l.b16 %v665
  %v687 = vunpack.c.h.b16 %v665
  %v688 = vunpack.c.l.b16 %v666
  %v689 = vunpack.c.h.b16 %v666
  %v690 = vunpack.c.l.b16 %v667
  %v691 = vunpack.c.h.b16 %v667
  %v692 = vpack.c.b16 %v676, %v676
  %v693 = vpack.c.b16 %v677, %v677
  %v694 = vpack.c.b16 %v678, %v678
  %v695 = vpack.c.b16 %v679, %v679
  %v696 = vpack.c.b16 %v680, %v680
  %v697 = vpack.c.b16 %v681, %v681
  %v698 = vpack.c.b16 %v682, %v682
  %v699 = vpack.c.b16 %v683, %v683
  %v700 = vpack.c.b16 %v684, %v684
  %v701 = vpack.c.b16 %v685, %v685
  %v702 = vpack.c.b16 %v686, %v686
  %v703 = vpack.c.b16 %v687, %v687
  %v704 = vpack.c.b16 %v688, %v688
  %v705 = vpack.c.b16 %v689, %v689
  %v706 = vpack.c.b16 %v690, %v690
  %v707 = vpack.c.b16 %v691, %v691
  %708 = vrot.lane.b32.xlu0 %v692, 32
  %v709 = vpop.permute.xlu0 %708
  %710 = vrot.lane.b32.xlu0 %v693, 32
  %v711 = vpop.permute.xlu0 %710
  %712 = vrot.lane.b32.xlu0 %v694, 32
  %v713 = vpop.permute.xlu0 %712
  %714 = vrot.lane.b32.xlu0 %v695, 32
  %v715 = vpop.permute.xlu0 %714
  %716 = vrot.lane.b32.xlu0 %v696, 32
  %v717 = vpop.permute.xlu0 %716
  %718 = vrot.lane.b32.xlu0 %v697, 32
  %v719 = vpop.permute.xlu0 %718
  %720 = vrot.lane.b32.xlu0 %v698, 32
  %v721 = vpop.permute.xlu0 %720
  %722 = vrot.lane.b32.xlu0 %v699, 32
  %v723 = vpop.permute.xlu0 %722
  %724 = vrot.lane.b32.xlu0 %v700, 32
  %v725 = vpop.permute.xlu0 %724
  %726 = vrot.lane.b32.xlu0 %v701, 32
  %v727 = vpop.permute.xlu0 %726
  %728 = vrot.lane.b32.xlu0 %v702, 32
  %v729 = vpop.permute.xlu0 %728
  %730 = vrot.lane.b32.xlu0 %v703, 32
  %v731 = vpop.permute.xlu0 %730
  %732 = vrot.lane.b32.xlu0 %v704, 32
  %v733 = vpop.permute.xlu0 %732
  %734 = vrot.lane.b32.xlu0 %v705, 32
  %v735 = vpop.permute.xlu0 %734
  %736 = vrot.lane.b32.xlu0 %v706, 32
  %v737 = vpop.permute.xlu0 %736
  %738 = vrot.lane.b32.xlu0 %v707, 32
  %v739 = vpop.permute.xlu0 %738
  %vm756 = vcmask 519424
  %757 = vst.msk [vmem:[%s8] sm:$0xf] %vm756, %v709
  %758 = vst.msk [vmem:[%s8 + $0x4] sm:$0xf] %vm756, %v711
  %759 = vst.msk [vmem:[%s8 + $0x8] sm:$0xf] %vm756, %v713
  %760 = vst.msk [vmem:[%s8 + $0xc] sm:$0xf] %vm756, %v715
  %761 = vst.msk [vmem:[%s8 + $0x10] sm:$0xf] %vm756, %v717
  %762 = vst.msk [vmem:[%s8 + $0x14] sm:$0xf] %vm756, %v719
  %763 = vst.msk [vmem:[%s8 + $0x18] sm:$0xf] %vm756, %v721
  %764 = vst.msk [vmem:[%s8 + $0x1c] sm:$0xf] %vm756, %v723
  %765 = vst.msk [vmem:[%s8 + $0x20] sm:$0xf] %vm756, %v725
  %766 = vst.msk [vmem:[%s8 + $0x24] sm:$0xf] %vm756, %v727
  %767 = vst.msk [vmem:[%s8 + $0x28] sm:$0xf] %vm756, %v729
  %768 = vst.msk [vmem:[%s8 + $0x2c] sm:$0xf] %vm756, %v731
  %769 = vst.msk [vmem:[%s8 + $0x30] sm:$0xf] %vm756, %v733
  %770 = vst.msk [vmem:[%s8 + $0x34] sm:$0xf] %vm756, %v735
  %771 = vst.msk [vmem:[%s8 + $0x38] sm:$0xf] %vm756, %v737
  %772 = vst.msk [vmem:[%s8 + $0x3c] sm:$0xf] %vm756, %v739
  %v773 = vld [vmem:[%s7] sm:$0x3]
  %782 = vrot.lane.b32.xlu0 %v192, 124
  %v783 = vpop.permute.xlu0 %782
  %784 = vrot.lane.b32.xlu0 %v193, 124
  %v785 = vpop.permute.xlu0 %784
  %786 = vrot.lane.b32.xlu0 %v194, 124
  %v787 = vpop.permute.xlu0 %786
  %788 = vrot.lane.b32.xlu0 %v195, 124
  %v789 = vpop.permute.xlu0 %788
  %790 = vrot.lane.b32.xlu0 %v196, 124
  %v791 = vpop.permute.xlu0 %790
  %792 = vrot.lane.b32.xlu0 %v197, 124
  %v793 = vpop.permute.xlu0 %792
  %794 = vrot.lane.b32.xlu0 %v198, 124
  %v795 = vpop.permute.xlu0 %794
  %796 = vrot.lane.b32.xlu0 %v199, 124
  %v797 = vpop.permute.xlu0 %796
  %v799 = vsel %vm201, %v783, 0
  %v802 = vsel %vm201, %v785, 0
  %v805 = vsel %vm201, %v787, 0
  %v808 = vsel %vm201, %v789, 0
  %v811 = vsel %vm201, %v791, 0
  %v814 = vsel %vm201, %v793, 0
  %v817 = vsel %vm201, %v795, 0
  %v820 = vsel %vm201, %v797, 0
  %v823 = vsel %vm226, %v773, 0
  %825 = vmatprep.subr.bf16.mxu0 0
  %826 = vmatpush1.bf16.msra.mxu0 %v823
  %827 = vmatprep.subr.bf16.mxu0 0
  %828 = vmatpush1.bf16.msra.mxu0 0
  %829 = vmatprep.subr.bf16.mxu0 0
  %830 = vmatpush1.bf16.msra.mxu0 0
  %831 = vmatprep.subr.bf16.mxu0 0
  %832 = vmatpush1.bf16.msra.mxu0 0
  %833 = vmatprep.subr.bf16.mxu0 0
  %834 = vmatpush1.bf16.msra.mxu0 0
  %835 = vmatprep.subr.bf16.mxu0 0
  %836 = vmatpush1.bf16.msra.mxu0 0
  %837 = vmatprep.subr.bf16.mxu0 0
  %838 = vmatpush1.bf16.msra.mxu0 0
  %839 = vmatprep.subr.bf16.mxu0 0
  %840 = vmatpush1.bf16.msra.mxu0 0
  %841 = vmatprep.subr.bf16.mxu0 0
  %842 = vmatpush1.bf16.msra.mxu0 0
  %843 = vmatprep.subr.bf16.mxu0 0
  %844 = vmatpush1.bf16.msra.mxu0 0
  %845 = vmatprep.subr.bf16.mxu0 0
  %846 = vmatpush1.bf16.msra.mxu0 0
  %847 = vmatprep.subr.bf16.mxu0 0
  %848 = vmatpush1.bf16.msra.mxu0 0
  %849 = vmatprep.subr.bf16.mxu0 0
  %850 = vmatpush1.bf16.msra.mxu0 0
  %851 = vmatprep.subr.bf16.mxu0 0
  %852 = vmatpush1.bf16.msra.mxu0 0
  %853 = vmatprep.subr.bf16.mxu0 0
  %854 = vmatpush1.bf16.msra.mxu0 0
  %855 = vmatprep.subr.bf16.mxu0 0
  %856 = vmatpush1.bf16.msra.mxu0 0
  %857 = vmatprep.mubr.bf16.mxu0 0
  %858 = vmatmul.mubr.bf16.gmra.mrb[0].mxu0 %v799
  %v859 = vpop.f32.mrb[0].mxu0
  %v860 = vadd.f32 0.0, %v859
  %v861 = vpop.f32.mrb[0].mxu0
  %v862 = vpop.f32.mrb[0].mxu0
  %v863 = vadd.f32 0.0, %v862
  %v864 = vpop.f32.mrb[0].mxu0
  %865 = vmatprep.mubr.bf16.mxu0 0
  %866 = vmatmul.mubr.bf16.gmra.mrb[0].mxu0 %v802
  %v867 = vpop.f32.mrb[0].mxu0
  %v868 = vadd.f32 0.0, %v867
  %v869 = vpop.f32.mrb[0].mxu0
  %v870 = vpop.f32.mrb[0].mxu0
  %v871 = vadd.f32 0.0, %v870
  %v872 = vpop.f32.mrb[0].mxu0
  %873 = vmatprep.mubr.bf16.mxu0 0
  %874 = vmatmul.mubr.bf16.gmra.mrb[0].mxu0 %v805
  %v875 = vpop.f32.mrb[0].mxu0
  %v876 = vadd.f32 0.0, %v875
  %v877 = vpop.f32.mrb[0].mxu0
  %v878 = vpop.f32.mrb[0].mxu0
  %v879 = vadd.f32 0.0, %v878
  %v880 = vpop.f32.mrb[0].mxu0
  %881 = vmatprep.mubr.bf16.mxu0 0
  %882 = vmatmul.mubr.bf16.gmra.mrb[0].mxu0 %v808
  %v883 = vpop.f32.mrb[0].mxu0
  %v884 = vadd.f32 0.0, %v883
  %v885 = vpop.f32.mrb[0].mxu0
  %v886 = vpop.f32.mrb[0].mxu0
  %v887 = vadd.f32 0.0, %v886
  %v888 = vpop.f32.mrb[0].mxu0
  %889 = vmatprep.mubr.bf16.mxu0 0
  %890 = vmatmul.mubr.bf16.gmra.mrb[0].mxu0 %v811
  %v891 = vpop.f32.mrb[0].mxu0
  %v892 = vadd.f32 0.0, %v891
  %v893 = vpop.f32.mrb[0].mxu0
  %v894 = vpop.f32.mrb[0].mxu0
  %v895 = vadd.f32 0.0, %v894
  %v896 = vpop.f32.mrb[0].mxu0
  %897 = vmatprep.mubr.bf16.mxu0 0
  %898 = vmatmul.mubr.bf16.gmra.mrb[0].mxu0 %v814
  %v899 = vpop.f32.mrb[0].mxu0
  %v900 = vadd.f32 0.0, %v899
  %v901 = vpop.f32.mrb[0].mxu0
  %v902 = vpop.f32.mrb[0].mxu0
  %v903 = vadd.f32 0.0, %v902
  %v904 = vpop.f32.mrb[0].mxu0
  %905 = vmatprep.mubr.bf16.mxu0 0
  %906 = vmatmul.mubr.bf16.gmra.mrb[0].mxu0 %v817
  %v907 = vpop.f32.mrb[0].mxu0
  %v908 = vadd.f32 0.0, %v907
  %v909 = vpop.f32.mrb[0].mxu0
  %v910 = vpop.f32.mrb[0].mxu0
  %v911 = vadd.f32 0.0, %v910
  %v912 = vpop.f32.mrb[0].mxu0
  %913 = vmatprep.mubr.bf16.mxu0 0
  %914 = vmatmul.mubr.bf16.gmra.mrb[0].mxu0 %v820
  %v915 = vpop.f32.mrb[0].mxu0
  %v916 = vadd.f32 0.0, %v915
  %v917 = vpop.f32.mrb[0].mxu0
  %v918 = vpop.f32.mrb[0].mxu0
  %v919 = vadd.f32 0.0, %v918
  %v920 = vpop.f32.mrb[0].mxu0
  %921 = vdwg.mxu0
  %v922 = vld [vmem:[%s3] sm:$0xf]
  %v923 = vld [vmem:[%s3 + $0x4] sm:$0xf]
  %v924 = vld [vmem:[%s3 + $0x8] sm:$0xf]
  %v925 = vld [vmem:[%s3 + $0xc] sm:$0xf]
  %v926 = vld [vmem:[%s4 + $0x2] sm:$0x1]
  %v927 = vlaneseq
  %v928 = vshrl.u32 %v927, 7
  %v929 = vsub.s32 0, %v928
  %v930 = vrot.slane %v926, %v929
  %v935 = vunpack.c.l.b16 %v922
  %v936 = vunpack.c.l.b16 %v923
  %v937 = vunpack.c.l.b16 %v924
  %v938 = vunpack.c.l.b16 %v925
  %v939 = vpack.c.b16 %v936, %v935
  %v940 = vpack.c.b16 %v938, %v937
  %943 = vmatprep.subr.bf16.mxu0 0
  %944 = vmatpush1.bf16.msra.mxu0 %v939
  %945 = vmatprep.subr.bf16.mxu0 0
  %946 = vmatpush1.bf16.msra.mxu0 %v940
  %947 = vmatprep.subr.bf16.mxu0 0
  %948 = vmatpush1.bf16.msra.mxu0 0
  %949 = vmatprep.subr.bf16.mxu0 0
  %950 = vmatpush1.bf16.msra.mxu0 0
  %951 = vmatprep.subr.bf16.mxu0 0
  %952 = vmatpush1.bf16.msra.mxu0 0
  %953 = vmatprep.subr.bf16.mxu0 0
  %954 = vmatpush1.bf16.msra.mxu0 0
  %955 = vmatprep.subr.bf16.mxu0 0
  %956 = vmatpush1.bf16.msra.mxu0 0
  %957 = vmatprep.subr.bf16.mxu0 0
  %958 = vmatpush1.bf16.msra.mxu0 0
  %959 = vmatprep.subr.bf16.mxu0 0
  %960 = vmatpush1.bf16.msra.mxu0 0
  %961 = vmatprep.subr.bf16.mxu0 0
  %962 = vmatpush1.bf16.msra.mxu0 0
  %963 = vmatprep.subr.bf16.mxu0 0
  %964 = vmatpush1.bf16.msra.mxu0 0
  %965 = vmatprep.subr.bf16.mxu0 0
  %966 = vmatpush1.bf16.msra.mxu0 0
  %967 = vmatprep.subr.bf16.mxu0 0
  %968 = vmatpush1.bf16.msra.mxu0 0
  %969 = vmatprep.subr.bf16.mxu0 0
  %970 = vmatpush1.bf16.msra.mxu0 0
  %971 = vmatprep.subr.bf16.mxu0 0
  %972 = vmatpush1.bf16.msra.mxu0 0
  %973 = vmatprep.subr.bf16.mxu0 0
  %974 = vmatpush1.bf16.msra.mxu0 0
  %975 = vmatprep.mubr.bf16.mxu0 0
  %976 = vmatmul.mubr.bf16.gmra.mrb[0].mxu0 %v72
  %v977 = vpop.f32.mrb[0].mxu0
  %v978 = vadd.f32 %v930, %v977
  %v979 = vpop.f32.mrb[0].mxu0
  %v980 = vpop.f32.mrb[0].mxu0
  %v981 = vadd.f32 %v930, %v980
  %v982 = vpop.f32.mrb[0].mxu0
  %983 = vmatprep.mubr.bf16.mxu0 0
  %984 = vmatmul.mubr.bf16.gmra.mrb[0].mxu0 %v75
  %v985 = vpop.f32.mrb[0].mxu0
  %v986 = vadd.f32 %v930, %v985
  %v987 = vpop.f32.mrb[0].mxu0
  %v988 = vpop.f32.mrb[0].mxu0
  %v989 = vadd.f32 %v930, %v988
  %v990 = vpop.f32.mrb[0].mxu0
  %991 = vmatprep.mubr.bf16.mxu0 0
  %992 = vmatmul.mubr.bf16.gmra.mrb[0].mxu0 %v78
  %v993 = vpop.f32.mrb[0].mxu0
  %v994 = vadd.f32 %v930, %v993
  %v995 = vpop.f32.mrb[0].mxu0
  %v996 = vpop.f32.mrb[0].mxu0
  %v997 = vadd.f32 %v930, %v996
  %v998 = vpop.f32.mrb[0].mxu0
  %999 = vmatprep.mubr.bf16.mxu0 0
  %1000 = vmatmul.mubr.bf16.gmra.mrb[0].mxu0 %v81
  %v1001 = vpop.f32.mrb[0].mxu0
  %v1002 = vadd.f32 %v930, %v1001
  %v1003 = vpop.f32.mrb[0].mxu0
  %v1004 = vpop.f32.mrb[0].mxu0
  %v1005 = vadd.f32 %v930, %v1004
  %v1006 = vpop.f32.mrb[0].mxu0
  %1007 = vmatprep.mubr.bf16.mxu0 0
  %1008 = vmatmul.mubr.bf16.gmra.mrb[0].mxu0 %v84
  %v1009 = vpop.f32.mrb[0].mxu0
  %v1010 = vadd.f32 %v930, %v1009
  %v1011 = vpop.f32.mrb[0].mxu0
  %v1012 = vpop.f32.mrb[0].mxu0
  %v1013 = vadd.f32 %v930, %v1012
  %v1014 = vpop.f32.mrb[0].mxu0
  %1015 = vmatprep.mubr.bf16.mxu0 0
  %1016 = vmatmul.mubr.bf16.gmra.mrb[0].mxu0 %v87
  %v1017 = vpop.f32.mrb[0].mxu0
  %v1018 = vadd.f32 %v930, %v1017
  %v1019 = vpop.f32.mrb[0].mxu0
  %v1020 = vpop.f32.mrb[0].mxu0
  %v1021 = vadd.f32 %v930, %v1020
  %v1022 = vpop.f32.mrb[0].mxu0
  %1023 = vmatprep.mubr.bf16.mxu0 0
  %1024 = vmatmul.mubr.bf16.gmra.mrb[0].mxu0 %v90
  %v1025 = vpop.f32.mrb[0].mxu0
  %v1026 = vadd.f32 %v930, %v1025
  %v1027 = vpop.f32.mrb[0].mxu0
  %v1028 = vpop.f32.mrb[0].mxu0
  %v1029 = vadd.f32 %v930, %v1028
  %v1030 = vpop.f32.mrb[0].mxu0
  %1031 = vmatprep.mubr.bf16.mxu0 0
  %1032 = vmatmul.mubr.bf16.gmra.mrb[0].mxu0 %v93
  %v1033 = vpop.f32.mrb[0].mxu0
  %v1034 = vadd.f32 %v930, %v1033
  %v1035 = vpop.f32.mrb[0].mxu0
  %v1036 = vpop.f32.mrb[0].mxu0
  %v1037 = vadd.f32 %v930, %v1036
  %v1038 = vpop.f32.mrb[0].mxu0
  %1039 = vdwg.mxu0
  %v1040 = vadd.f32 %v978, %v860
  %v1041 = vadd.f32 %v981, %v863
  %v1042 = vadd.f32 %v986, %v868
  %v1043 = vadd.f32 %v989, %v871
  %v1044 = vadd.f32 %v994, %v876
  %v1045 = vadd.f32 %v997, %v879
  %v1046 = vadd.f32 %v1002, %v884
  %v1047 = vadd.f32 %v1005, %v887
  %v1048 = vadd.f32 %v1010, %v892
  %v1049 = vadd.f32 %v1013, %v895
  %v1050 = vadd.f32 %v1018, %v900
  %v1051 = vadd.f32 %v1021, %v903
  %v1052 = vadd.f32 %v1026, %v908
  %v1053 = vadd.f32 %v1029, %v911
  %v1054 = vadd.f32 %v1034, %v916
  %v1055 = vadd.f32 %v1037, %v919
  %v1056 = vpack.c.bf16 %v1041, %v1040
  %v1057 = vpack.c.bf16 %v1043, %v1042
  %v1058 = vpack.c.bf16 %v1045, %v1044
  %v1059 = vpack.c.bf16 %v1047, %v1046
  %v1060 = vpack.c.bf16 %v1049, %v1048
  %v1061 = vpack.c.bf16 %v1051, %v1050
  %v1062 = vpack.c.bf16 %v1053, %v1052
  %v1063 = vpack.c.bf16 %v1055, %v1054
  %v1072 = vunpack.c.l.b16 %v1056
  %v1073 = vunpack.c.h.b16 %v1056
  %v1074 = vunpack.c.l.b16 %v1057
  %v1075 = vunpack.c.h.b16 %v1057
  %v1076 = vunpack.c.l.b16 %v1058
  %v1077 = vunpack.c.h.b16 %v1058
  %v1078 = vunpack.c.l.b16 %v1059
  %v1079 = vunpack.c.h.b16 %v1059
  %v1080 = vunpack.c.l.b16 %v1060
  %v1081 = vunpack.c.h.b16 %v1060
  %v1082 = vunpack.c.l.b16 %v1061
  %v1083 = vunpack.c.h.b16 %v1061
  %v1084 = vunpack.c.l.b16 %v1062
  %v1085 = vunpack.c.h.b16 %v1062
  %v1086 = vunpack.c.l.b16 %v1063
  %v1087 = vunpack.c.h.b16 %v1063
  %v1088 = vpack.c.b16 %v1072, %v1072
  %v1089 = vpack.c.b16 %v1073, %v1073
  %v1090 = vpack.c.b16 %v1074, %v1074
  %v1091 = vpack.c.b16 %v1075, %v1075
  %v1092 = vpack.c.b16 %v1076, %v1076
  %v1093 = vpack.c.b16 %v1077, %v1077
  %v1094 = vpack.c.b16 %v1078, %v1078
  %v1095 = vpack.c.b16 %v1079, %v1079
  %v1096 = vpack.c.b16 %v1080, %v1080
  %v1097 = vpack.c.b16 %v1081, %v1081
  %v1098 = vpack.c.b16 %v1082, %v1082
  %v1099 = vpack.c.b16 %v1083, %v1083
  %v1100 = vpack.c.b16 %v1084, %v1084
  %v1101 = vpack.c.b16 %v1085, %v1085
  %v1102 = vpack.c.b16 %v1086, %v1086
  %v1103 = vpack.c.b16 %v1087, %v1087
  %1104 = vrot.lane.b32.xlu0 %v1088, 64
  %v1105 = vpop.permute.xlu0 %1104
  %1106 = vrot.lane.b32.xlu0 %v1089, 64
  %v1107 = vpop.permute.xlu0 %1106
  %1108 = vrot.lane.b32.xlu0 %v1090, 64
  %v1109 = vpop.permute.xlu0 %1108
  %1110 = vrot.lane.b32.xlu0 %v1091, 64
  %v1111 = vpop.permute.xlu0 %1110
  %1112 = vrot.lane.b32.xlu0 %v1092, 64
  %v1113 = vpop.permute.xlu0 %1112
  %1114 = vrot.lane.b32.xlu0 %v1093, 64
  %v1115 = vpop.permute.xlu0 %1114
  %1116 = vrot.lane.b32.xlu0 %v1094, 64
  %v1117 = vpop.permute.xlu0 %1116
  %1118 = vrot.lane.b32.xlu0 %v1095, 64
  %v1119 = vpop.permute.xlu0 %1118
  %1120 = vrot.lane.b32.xlu0 %v1096, 64
  %v1121 = vpop.permute.xlu0 %1120
  %1122 = vrot.lane.b32.xlu0 %v1097, 64
  %v1123 = vpop.permute.xlu0 %1122
  %1124 = vrot.lane.b32.xlu0 %v1098, 64
  %v1125 = vpop.permute.xlu0 %1124
  %1126 = vrot.lane.b32.xlu0 %v1099, 64
  %v1127 = vpop.permute.xlu0 %1126
  %1128 = vrot.lane.b32.xlu0 %v1100, 64
  %v1129 = vpop.permute.xlu0 %1128
  %1130 = vrot.lane.b32.xlu0 %v1101, 64
  %v1131 = vpop.permute.xlu0 %1130
  %1132 = vrot.lane.b32.xlu0 %v1102, 64
  %v1133 = vpop.permute.xlu0 %1132
  %1134 = vrot.lane.b32.xlu0 %v1103, 64
  %v1135 = vpop.permute.xlu0 %1134
  %vm1152 = vcmask 781824
  %1153 = vst.msk [vmem:[%s8] sm:$0xf] %vm1152, %v1105
  %1154 = vst.msk [vmem:[%s8 + $0x4] sm:$0xf] %vm1152, %v1107
  %1155 = vst.msk [vmem:[%s8 + $0x8] sm:$0xf] %vm1152, %v1109
  %1156 = vst.msk [vmem:[%s8 + $0xc] sm:$0xf] %vm1152, %v1111
  %1157 = vst.msk [vmem:[%s8 + $0x10] sm:$0xf] %vm1152, %v1113
  %1158 = vst.msk [vmem:[%s8 + $0x14] sm:$0xf] %vm1152, %v1115
  %1159 = vst.msk [vmem:[%s8 + $0x18] sm:$0xf] %vm1152, %v1117
  %1160 = vst.msk [vmem:[%s8 + $0x1c] sm:$0xf] %vm1152, %v1119
  %1161 = vst.msk [vmem:[%s8 + $0x20] sm:$0xf] %vm1152, %v1121
  %1162 = vst.msk [vmem:[%s8 + $0x24] sm:$0xf] %vm1152, %v1123
  %1163 = vst.msk [vmem:[%s8 + $0x28] sm:$0xf] %vm1152, %v1125
  %1164 = vst.msk [vmem:[%s8 + $0x2c] sm:$0xf] %vm1152, %v1127
  %1165 = vst.msk [vmem:[%s8 + $0x30] sm:$0xf] %vm1152, %v1129
  %1166 = vst.msk [vmem:[%s8 + $0x34] sm:$0xf] %vm1152, %v1131
  %1167 = vst.msk [vmem:[%s8 + $0x38] sm:$0xf] %vm1152, %v1133
  %1168 = vst.msk [vmem:[%s8 + $0x3c] sm:$0xf] %vm1152, %v1135
  // Predicated region
  $region34: #{tpu_custom_call.1} parent=0 // pred_check
    _
  $region35: #{tpu_custom_call.1} parent=0 // pred_check_branch
    %1170 = sbr.rel (0) target = $region37
  $region36: #{tpu_custom_call.1} parent=0 // pred_region
    _
  $region37: #{tpu_custom_call.1} parent=0 // pred_fallthru
    _
  // Predicated region
  $region38: #{tpu_custom_call.1} parent=0 // pred_check
    _
  $region39: #{tpu_custom_call.1} parent=0 // pred_check_branch
    %1172 = sbr.rel (0) target = $region41
  $region40: #{tpu_custom_call.1} parent=0 // pred_region
    _
  $region41: #{tpu_custom_call.1} parent=0 // pred_fallthru
    _

</llo_original>
